<compile_context>
chip_gen: v7x
topology: tpu7x:2x2x1
jax: 0.10.0
libtpu: 0.0.40
codegen_flags: <defaults>
</compile_context>

<pallas_src>
import functools
import math

import jax
import jax.numpy as jnp
from jax.experimental import pallas as pl
from jax.experimental.pallas import tpu as pltpu

EPS = 1e-6
ALPHA = 1.0              # custom LayerNorm scale parameter (torch.ones(1))
BETA = 1.0               # custom LayerNorm bias  parameter (torch.ones(1))
MM_DTYPE = jnp.bfloat16  # matmul operand dtype (accumulation stays f32)


def _decoder_kernel(x_ref, pe_ref, wqkv_ref, w1_ref, b1_ref, w2_ref, b2_ref,
                    wl_ref, bl_ref, o_ref, *, n_layer, eps):
    tb, s, d = x_ref.shape
    r = tb * s

    x3 = x_ref[...]                      # (TB, S, D) f32
    pe = pe_ref[...]                     # (S, D)     f32

    # ---- PositionalEncoder + top-level residual (dropout == identity in eval mode) ----
    # Carry activations as a flat (rows, features) 2-D slab so every non-attention matmul is one
    # large-M MXU call instead of TB tiny batched ones.
    x = (x3 + (x3 + pe[None, :, :])).reshape(r, d)

    # Causal mask over sequence positions (== torch.tril(ones(S, S)) in the module).
    row = jax.lax.broadcasted_iota(jnp.int32, (s, s), 0)
    col = jax.lax.broadcasted_iota(jnp.int32, (s, s), 1)
    causal = (row >= col)[None, :, :]    # (1, S, S); diagonal never masked -> -inf is NaN-safe

    inv_dm1 = 1.0 / (d - 1)

    def layer_norm(v):
        # mean / *unbiased* std over features, eps added to std (module's custom LayerNorm).
        mean = jnp.mean(v, axis=-1, keepdims=True)
        cen = v - mean
        std = jnp.sqrt(jnp.sum(cen * cen, axis=-1, keepdims=True) * inv_dm1)
        inv = pl.reciprocal(std + eps, approx=True)          # EUP slot, off the VALU path
        return ALPHA * cen * inv + BETA

    def body(l, x):
        # ---- masked self-attention sub-block (fused QKV projection) ----
        xn = layer_norm(x).astype(MM_DTYPE)                   # single bf16 cast for Q,K,V
        qkv = jnp.dot(xn, wqkv_ref[l],
                      preferred_element_type=jnp.float32).astype(MM_DTYPE)  # (R, 3D)
        q = qkv[:, :d].reshape(tb, s, d)
        k = qkv[:, d:2 * d].reshape(tb, s, d)
        v = qkv[:, 2 * d:].reshape(tb, s, d)

        wei = jnp.einsum("bqd,bkd->bqk", q, k, preferred_element_type=jnp.float32)
        wei = jnp.where(causal, wei, -jnp.inf)
        wei = wei - jnp.max(wei, axis=-1, keepdims=True)
        p = jnp.exp(wei)
        p = p * pl.reciprocal(jnp.sum(p, axis=-1, keepdims=True), approx=True)
        attn = jnp.einsum("bqk,bkd->bqd", p.astype(MM_DTYPE), v,
                          preferred_element_type=jnp.float32)
        x = x + attn.reshape(r, d)

        # ---- position-wise feed-forward sub-block: relu(L2(L1(LN(.)))) ----
        xn2 = layer_norm(x).astype(MM_DTYPE)
        h = jnp.dot(xn2, w1_ref[l], preferred_element_type=jnp.float32) + b1_ref[l]
        h = jnp.dot(h.astype(MM_DTYPE), w2_ref[l],
                    preferred_element_type=jnp.float32) + b2_ref[l]
        x = x + jnp.maximum(h, 0.0)        # FFN dropout == identity (inference)
        return x

    x = jax.lax.fori_loop(0, n_layer, body, x)

    # ---- lmHead ----
    logits = jnp.dot(x.astype(MM_DTYPE), wl_ref[...],
                     preferred_element_type=jnp.float32) + bl_ref[...]
    o_ref[...] = logits.reshape(tb, s, d).astype(o_ref.dtype)


def _sinusoidal_pe(max_len, d_model):
    k = jnp.arange(max_len, dtype=jnp.float32)[:, None]
    div = jnp.exp(jnp.arange(0, d_model, 2, dtype=jnp.float32)
                  * (-math.log(10000.0) / d_model))
    ang = k * div
    pe = jnp.zeros((max_len, d_model), jnp.float32)
    pe = pe.at[:, 0::2].set(jnp.sin(ang))
    pe = pe.at[:, 1::2].set(jnp.cos(ang))
    return pe


def init_params(key, d_model, n_layer):
    """PyTorch-style uniform(-1/sqrt(d), 1/sqrt(d)) Linear init; matrices stored in x@W layout."""
    bound = 1.0 / math.sqrt(d_model)
    ks = jax.random.split(key, 9)
    u = lambda k_, shape: jax.random.uniform(k_, shape, jnp.float32, -bound, bound)
    return {
        "wq": u(ks[0], (n_layer, d_model, d_model)),
        "wk": u(ks[1], (n_layer, d_model, d_model)),
        "wv": u(ks[2], (n_layer, d_model, d_model)),
        "w1": u(ks[3], (n_layer, d_model, d_model)),
        "b1": u(ks[4], (n_layer, 1, d_model)),
        "w2": u(ks[5], (n_layer, d_model, d_model)),
        "b2": u(ks[6], (n_layer, 1, d_model)),
        "wl": u(ks[7], (d_model, d_model)),
        "bl": u(ks[8], (1, d_model)),
    }


def transformer_decoder(x, params, *, max_len=10, eps=EPS, tile_b=None):
    """x: (B, S, D) f32. Returns logits (B, S, D) f32 (targets=None path of the module)."""
    B, S, D = x.shape
    L = params["wq"].shape[0]
    assert S <= max_len, "sequence longer than PositionalEncoder max_len"

    # Batch tiling: biggest block under a ~2 MiB activation budget; only force >=2 grid steps
    # (megacore sharding / DMA pipelining) when each step still moves >= ~1 MiB.  At the toy
    # shape this yields a single grid step (per-step overhead would otherwise dominate).
    row_bytes = S * D * 4
    if tile_b is None:
        tile_b = max(1, min(B, (2 << 20) // max(1, row_bytes)))
        if B >= 2 and (B // 2) * row_bytes >= (1 << 20):
            tile_b = min(tile_b, B // 2)
        while B % tile_b:
            tile_b -= 1
    grid = (B // tile_b,)

    pe = _sinusoidal_pe(max_len, D)[:S]

    # Weights in bf16 (halves resident VMEM / HBM traffic, native MXU dtype); biases stay f32 and
    # are added after the f32-accumulated matmul.  Q|K|V fused along the output dimension.
    f = MM_DTYPE
    wqkv = jnp.concatenate([params["wq"], params["wk"], params["wv"]], axis=-1).astype(f)
    w1, w2, wl = params["w1"].astype(f), params["w2"].astype(f), params["wl"].astype(f)
    b1, b2, bl = params["b1"], params["b2"], params["bl"]

    kernel = functools.partial(_decoder_kernel, n_layer=L, eps=eps)

    def resident(shape):
        zeros = (0,) * len(shape)
        return pl.BlockSpec(shape, lambda i, _z=zeros: _z)

    # VMEM budget derived from the actual block + resident-weight footprint (conservatively
    # assuming everything is double-buffered), clamped below the chip's physical capacity.
    def nbytes(a):
        return int(a.size) * a.dtype.itemsize
    block_bytes = tile_b * S * D * 4
    weight_bytes = sum(nbytes(a) for a in (pe, wqkv, w1, b1, w2, b2, wl, bl))
    need = 2 * (2 * block_bytes) + 2 * weight_bytes + (4 << 20)
    try:
        cap = int(pltpu.get_tpu_info().vmem_capacity_bytes)
    except Exception:
        cap = 64 << 20  # v7x-safe assumption if the query is unavailable
    vmem_limit = int(min(cap - (8 << 20), max(need, 32 << 20)))

    out = pl.pallas_call(
        kernel,
        out_shape=jax.ShapeDtypeStruct((B, S, D), jnp.float32),
        grid_spec=pl.GridSpec(
            grid=grid,
            in_specs=[
                pl.BlockSpec((tile_b, S, D), lambda i: (i, 0, 0)),  # x  (streamed per tile)
                resident((S, D)),                                   # positional encoding
                resident((L, D, 3 * D)),                            # fused Wq|Wk|Wv (resident)
                resident((L, D, D)),                                # FFN L1 weight
                resident((L, 1, D)),                                # FFN L1 bias
                resident((L, D, D)),                                # FFN L2 weight
                resident((L, 1, D)),                                # FFN L2 bias
                resident((D, D)),                                   # lmHead weight
                resident((1, D)),                                   # lmHead bias
            ],
            out_specs=pl.BlockSpec((tile_b, S, D), lambda i: (i, 0, 0)),
        ),
        compiler_params=pltpu.CompilerParams(
            dimension_semantics=("parallel",),
            vmem_limit_bytes=vmem_limit,
        ),
    )(x, pe, wqkv, w1, b1, w2, b2, wl, bl)
    return out


def _reference_forward(x, params, pe, eps=EPS):
    """Pure-JAX f32 mirror of the module's forward (for tolerance checking)."""
    B, S, D = x.shape
    x = x + (x + pe[None, :S, :])
    mask = jnp.tril(jnp.ones((S, S), bool))[None, :, :]

    def ln(v):
        m = v.mean(-1, keepdims=True)
        c = v - m
        std = jnp.sqrt((c * c).sum(-1, keepdims=True) / (D - 1))
        return ALPHA * c / (std + eps) + BETA

    L = params["wq"].shape[0]
    for l in range(L):
        xn = ln(x)
        q = xn @ params["wq"][l]
        k = xn @ params["wk"][l]
        v = xn @ params["wv"][l]
        wei = jnp.einsum("bqd,bkd->bqk", q, k)
        wei = jnp.where(mask, wei, -jnp.inf)
        p = jax.nn.softmax(wei, axis=-1)
        x = x + jnp.einsum("bqk,bkd->bqd", p, v)
        xn2 = ln(x)
        h = xn2 @ params["w1"][l] + params["b1"][l]
        h = h @ params["w2"][l] + params["b2"][l]
        x = x + jnp.maximum(h, 0.0)
    return x @ params["wl"] + params["bl"]


if __name__ == "__main__":
    # Shapes implied by the module: d_model=8, n_layer=6, batch_size=8, and the causal mask is
    # tril(ones(8, 8)) so seq must be 8.
    B, S, D, L = 8, 8, 8, 6
    key = jax.random.PRNGKey(0)
    k_x, k_p = jax.random.split(key)
    x = jax.random.normal(k_x, (B, S, D), dtype=jnp.float32)
    params = init_params(k_p, D, L)

    logits = transformer_decoder(x, params)
    logits = jax.block_until_ready(logits)

    assert logits.shape == (B, S, D)
    assert bool(jnp.all(jnp.isfinite(logits)))

    # Loose tolerance vs f32 reference (kernel uses bf16 matmul operands + approx reciprocals).
    ref = _reference_forward(x, params, _sinusoidal_pe(10, D))
    rel_err = float(jnp.max(jnp.abs(logits - ref)) / (jnp.max(jnp.abs(ref)) + 1e-6))
    assert rel_err < 0.25, f"kernel deviates from f32 reference: rel_err={rel_err}"

    print("KERNEL_OK")
</pallas_src>

<mosaic_0001>
module attributes {stable_mosaic.version = 11 : i64} {
  func.func @_decoder_kernel(%arg0: i32, %arg1: memref<8x8x8xf32, #tpu.memory_space<vmem>>, %arg2: memref<8x8xf32, #tpu.memory_space<vmem>>, %arg3: memref<6x8x24xbf16, #tpu.memory_space<vmem>>, %arg4: memref<6x8x8xbf16, #tpu.memory_space<vmem>>, %arg5: memref<6x1x8xf32, #tpu.memory_space<vmem>>, %arg6: memref<6x8x8xbf16, #tpu.memory_space<vmem>>, %arg7: memref<6x1x8xf32, #tpu.memory_space<vmem>>, %arg8: memref<8x8xbf16, #tpu.memory_space<vmem>>, %arg9: memref<1x8xf32, #tpu.memory_space<vmem>>, %arg10: memref<8x8x8xf32, #tpu.memory_space<vmem>>) attributes {dimension_semantics = [#tpu.dimension_semantics<parallel>], iteration_bounds = array<i64: 1>, scalar_prefetch = 0 : i64, scratch_operands = 0 : i64, tpu.core_type = #tpu.core_type<tc>, window_params = [{transform_indices = @transform_0, window_bounds = array<i64: 8, 8, 8>}, {pipeline_mode = #tpu.pipeline_mode<synchronous>, transform_indices = @transform_1, window_bounds = array<i64: 8, 8>}, {pipeline_mode = #tpu.pipeline_mode<synchronous>, transform_indices = @transform_2, window_bounds = array<i64: 6, 8, 24>}, {pipeline_mode = #tpu.pipeline_mode<synchronous>, transform_indices = @transform_3, window_bounds = array<i64: 6, 8, 8>}, {pipeline_mode = #tpu.pipeline_mode<synchronous>, transform_indices = @transform_4, window_bounds = array<i64: 6, 1, 8>}, {pipeline_mode = #tpu.pipeline_mode<synchronous>, transform_indices = @transform_5, window_bounds = array<i64: 6, 8, 8>}, {pipeline_mode = #tpu.pipeline_mode<synchronous>, transform_indices = @transform_6, window_bounds = array<i64: 6, 1, 8>}, {pipeline_mode = #tpu.pipeline_mode<synchronous>, transform_indices = @transform_7, window_bounds = array<i64: 8, 8>}, {pipeline_mode = #tpu.pipeline_mode<synchronous>, transform_indices = @transform_8, window_bounds = array<i64: 1, 8>}, {transform_indices = @transform_9, window_bounds = array<i64: 8, 8, 8>}]} {
    %c0 = arith.constant 0 : index
    %c0_0 = arith.constant 0 : index
    %c0_1 = arith.constant 0 : index
    %0 = vector.load %arg1[%c0, %c0_0, %c0_1] : memref<8x8x8xf32, #tpu.memory_space<vmem>>, vector<8x8x8xf32>
    %c0_2 = arith.constant 0 : index
    %c0_3 = arith.constant 0 : index
    %1 = vector.load %arg2[%c0_2, %c0_3] : memref<8x8xf32, #tpu.memory_space<vmem>>, vector<8x8xf32>
    %2 = vector.shape_cast %1 : vector<8x8xf32> to vector<1x8x8xf32>
    %3 = vector.broadcast %2 : vector<1x8x8xf32> to vector<8x8x8xf32>
    %4 = arith.addf %0, %3 : vector<8x8x8xf32>
    %5 = arith.addf %0, %4 : vector<8x8x8xf32>
    %6 = vector.shape_cast %5 : vector<8x8x8xf32> to vector<64x8xf32>
    %7 = tpu.iota {dimensions = array<i32: 0>} : vector<8x8xi32>
    %8 = tpu.iota {dimensions = array<i32: 1>} : vector<8x8xi32>
    %9 = arith.cmpi sge, %7, %8 : vector<8x8xi32>
    %10 = vector.shape_cast %9 : vector<8x8xi1> to vector<1x8x8xi1>
    %c0_i32 = arith.constant 0 : i32
    %c6_i32 = arith.constant 6 : i32
    %11 = arith.addi %c0_i32, %c6_i32 : i32
    %c1_i32 = arith.constant 1 : i32
    %12 = scf.for %arg11 = %c0_i32 to %11 step %c1_i32 iter_args(%arg12 = %6) -> (vector<64x8xf32>)  : i32 {
      %cst_12 = arith.constant dense<0.000000e+00> : vector<64xf32>
      %21 = vector.multi_reduction <add>, %arg12, %cst_12 [1] : vector<64x8xf32> to vector<64xf32>
      %22 = vector.shape_cast %21 : vector<64xf32> to vector<64x1xf32>
      %cst_13 = arith.constant 8.000000e+00 : f32
      %23 = vector.broadcast %cst_13 : f32 to vector<64x1xf32>
      %24 = arith.divf %22, %23 : vector<64x1xf32>
      %25 = vector.broadcast %24 : vector<64x1xf32> to vector<64x8xf32>
      %26 = arith.subf %arg12, %25 : vector<64x8xf32>
      %27 = arith.mulf %26, %26 : vector<64x8xf32>
      %cst_14 = arith.constant dense<0.000000e+00> : vector<64xf32>
      %28 = vector.multi_reduction <add>, %27, %cst_14 [1] : vector<64x8xf32> to vector<64xf32>
      %29 = vector.shape_cast %28 : vector<64xf32> to vector<64x1xf32>
      %cst_15 = arith.constant 0.142857149 : f32
      %30 = vector.broadcast %cst_15 : f32 to vector<64x1xf32>
      %31 = arith.mulf %29, %30 : vector<64x1xf32>
      %32 = math.sqrt %31 : vector<64x1xf32>
      %cst_16 = arith.constant 9.99999997E-7 : f32
      %33 = vector.broadcast %cst_16 : f32 to vector<64x1xf32>
      %34 = arith.addf %32, %33 : vector<64x1xf32>
      %35 = tpu.reciprocal %34 {approx = true} : vector<64x1xf32> -> vector<64x1xf32>
      %cst_17 = arith.constant 1.000000e+00 : f32
      %36 = vector.broadcast %cst_17 : f32 to vector<64x8xf32>
      %37 = arith.mulf %36, %26 : vector<64x8xf32>
      %38 = vector.broadcast %35 : vector<64x1xf32> to vector<64x8xf32>
      %39 = arith.mulf %37, %38 : vector<64x8xf32>
      %cst_18 = arith.constant 1.000000e+00 : f32
      %40 = vector.broadcast %cst_18 : f32 to vector<64x8xf32>
      %41 = arith.addf %39, %40 : vector<64x8xf32>
      %42 = arith.truncf %41 : vector<64x8xf32> to vector<64x8xbf16>
      %43 = arith.index_cast %arg11 : i32 to index
      %c0_19 = arith.constant 0 : index
      %c0_20 = arith.constant 0 : index
      %44 = vector.load %arg3[%43, %c0_19, %c0_20] : memref<6x8x24xbf16, #tpu.memory_space<vmem>>, vector<1x8x24xbf16>
      %45 = vector.shape_cast %44 : vector<1x8x24xbf16> to vector<8x24xbf16>
      %cst_21 = arith.constant dense<0.000000e+00> : vector<64x24xf32>
      %46 = tpu.matmul %42, %45, %cst_21 {dimension_numbers = #tpu.dot_dimension_numbers<[1], [0], [0], [1], [0, 0, 1, 1], [], []>} : vector<64x8xbf16>, vector<8x24xbf16>, vector<64x24xf32> -> vector<64x24xf32>
      %47 = arith.truncf %46 : vector<64x24xf32> to vector<64x24xbf16>
      %48 = vector.extract_strided_slice %47 {offsets = [0, 0], sizes = [64, 8], strides = [1, 1]} : vector<64x24xbf16> to vector<64x8xbf16>
      %49 = vector.shape_cast %48 : vector<64x8xbf16> to vector<8x8x8xbf16>
      %50 = vector.extract_strided_slice %47 {offsets = [0, 8], sizes = [64, 8], strides = [1, 1]} : vector<64x24xbf16> to vector<64x8xbf16>
      %51 = vector.shape_cast %50 : vector<64x8xbf16> to vector<8x8x8xbf16>
      %52 = vector.extract_strided_slice %47 {offsets = [0, 16], sizes = [64, 8], strides = [1, 1]} : vector<64x24xbf16> to vector<64x8xbf16>
      %53 = vector.shape_cast %52 : vector<64x8xbf16> to vector<8x8x8xbf16>
      "tpu.trace_start"() <{level = 10 : i32, message = "bqd,bkd->bqk"}> : () -> ()
      %cst_22 = arith.constant dense<0.000000e+00> : vector<8x8x8xf32>
      %54 = tpu.matmul %49, %51, %cst_22 {dimension_numbers = #tpu.dot_dimension_numbers<[2], [2], [1], [1], [0, 0, 0, 1, 1, 1], [0], [0]>} : vector<8x8x8xbf16>, vector<8x8x8xbf16>, vector<8x8x8xf32> -> vector<8x8x8xf32>
      %cst_23 = arith.constant 0xFF800000 : f32
      "tpu.trace_stop"() : () -> ()
      %55 = vector.shape_cast %10 : vector<1x8x8xi1> to vector<1x8x8xi1>
      %56 = vector.broadcast %55 : vector<1x8x8xi1> to vector<8x8x8xi1>
      %57 = vector.broadcast %cst_23 : f32 to vector<8x8x8xf32>
      %58 = arith.select %56, %54, %57 : vector<8x8x8xi1>, vector<8x8x8xf32>
      %cst_24 = arith.constant dense<0xFF800000> : vector<8x8xf32>
      %59 = vector.multi_reduction <maximumf>, %58, %cst_24 [2] : vector<8x8x8xf32> to vector<8x8xf32>
      %60 = vector.shape_cast %59 : vector<8x8xf32> to vector<8x8x1xf32>
      %61 = vector.broadcast %60 : vector<8x8x1xf32> to vector<8x8x8xf32>
      %62 = arith.subf %58, %61 : vector<8x8x8xf32>
      %63 = math.exp %62 : vector<8x8x8xf32>
      %cst_25 = arith.constant dense<0.000000e+00> : vector<8x8xf32>
      %64 = vector.multi_reduction <add>, %63, %cst_25 [2] : vector<8x8x8xf32> to vector<8x8xf32>
      %65 = vector.shape_cast %64 : vector<8x8xf32> to vector<8x8x1xf32>
      %66 = tpu.reciprocal %65 {approx = true} : vector<8x8x1xf32> -> vector<8x8x1xf32>
      %67 = vector.broadcast %66 : vector<8x8x1xf32> to vector<8x8x8xf32>
      %68 = arith.mulf %63, %67 : vector<8x8x8xf32>
      %69 = arith.truncf %68 : vector<8x8x8xf32> to vector<8x8x8xbf16>
      "tpu.trace_start"() <{level = 10 : i32, message = "bqk,bkd->bqd"}> : () -> ()
      %cst_26 = arith.constant dense<0.000000e+00> : vector<8x8x8xf32>
      %70 = tpu.matmul %69, %53, %cst_26 {dimension_numbers = #tpu.dot_dimension_numbers<[2], [1], [1], [2], [0, 0, 0, 1, 1, 2], [0], [0]>} : vector<8x8x8xbf16>, vector<8x8x8xbf16>, vector<8x8x8xf32> -> vector<8x8x8xf32>
      "tpu.trace_stop"() : () -> ()
      %71 = vector.shape_cast %70 : vector<8x8x8xf32> to vector<64x8xf32>
      %72 = arith.addf %arg12, %71 : vector<64x8xf32>
      %cst_27 = arith.constant dense<0.000000e+00> : vector<64xf32>
      %73 = vector.multi_reduction <add>, %72, %cst_27 [1] : vector<64x8xf32> to vector<64xf32>
      %74 = vector.shape_cast %73 : vector<64xf32> to vector<64x1xf32>
      %cst_28 = arith.constant 8.000000e+00 : f32
      %75 = vector.broadcast %cst_28 : f32 to vector<64x1xf32>
      %76 = arith.divf %74, %75 : vector<64x1xf32>
      %77 = vector.broadcast %76 : vector<64x1xf32> to vector<64x8xf32>
      %78 = arith.subf %72, %77 : vector<64x8xf32>
      %79 = arith.mulf %78, %78 : vector<64x8xf32>
      %cst_29 = arith.constant dense<0.000000e+00> : vector<64xf32>
      %80 = vector.multi_reduction <add>, %79, %cst_29 [1] : vector<64x8xf32> to vector<64xf32>
      %81 = vector.shape_cast %80 : vector<64xf32> to vector<64x1xf32>
      %cst_30 = arith.constant 0.142857149 : f32
      %82 = vector.broadcast %cst_30 : f32 to vector<64x1xf32>
      %83 = arith.mulf %81, %82 : vector<64x1xf32>
      %84 = math.sqrt %83 : vector<64x1xf32>
      %cst_31 = arith.constant 9.99999997E-7 : f32
      %85 = vector.broadcast %cst_31 : f32 to vector<64x1xf32>
      %86 = arith.addf %84, %85 : vector<64x1xf32>
      %87 = tpu.reciprocal %86 {approx = true} : vector<64x1xf32> -> vector<64x1xf32>
      %cst_32 = arith.constant 1.000000e+00 : f32
      %88 = vector.broadcast %cst_32 : f32 to vector<64x8xf32>
      %89 = arith.mulf %88, %78 : vector<64x8xf32>
      %90 = vector.broadcast %87 : vector<64x1xf32> to vector<64x8xf32>
      %91 = arith.mulf %89, %90 : vector<64x8xf32>
      %cst_33 = arith.constant 1.000000e+00 : f32
      %92 = vector.broadcast %cst_33 : f32 to vector<64x8xf32>
      %93 = arith.addf %91, %92 : vector<64x8xf32>
      %94 = arith.truncf %93 : vector<64x8xf32> to vector<64x8xbf16>
      %95 = arith.index_cast %arg11 : i32 to index
      %c0_34 = arith.constant 0 : index
      %c0_35 = arith.constant 0 : index
      %96 = vector.load %arg4[%95, %c0_34, %c0_35] : memref<6x8x8xbf16, #tpu.memory_space<vmem>>, vector<1x8x8xbf16>
      %97 = vector.shape_cast %96 : vector<1x8x8xbf16> to vector<8x8xbf16>
      %cst_36 = arith.constant dense<0.000000e+00> : vector<64x8xf32>
      %98 = tpu.matmul %94, %97, %cst_36 {dimension_numbers = #tpu.dot_dimension_numbers<[1], [0], [0], [1], [0, 0, 1, 1], [], []>} : vector<64x8xbf16>, vector<8x8xbf16>, vector<64x8xf32> -> vector<64x8xf32>
      %99 = arith.index_cast %arg11 : i32 to index
      %c0_37 = arith.constant 0 : index
      %c0_38 = arith.constant 0 : index
      %100 = vector.load %arg5[%99, %c0_37, %c0_38] : memref<6x1x8xf32, #tpu.memory_space<vmem>>, vector<1x1x8xf32>
      %101 = vector.shape_cast %100 : vector<1x1x8xf32> to vector<1x8xf32>
      %102 = vector.broadcast %101 : vector<1x8xf32> to vector<64x8xf32>
      %103 = arith.addf %98, %102 : vector<64x8xf32>
      %104 = arith.truncf %103 : vector<64x8xf32> to vector<64x8xbf16>
      %105 = arith.index_cast %arg11 : i32 to index
      %c0_39 = arith.constant 0 : index
      %c0_40 = arith.constant 0 : index
      %106 = vector.load %arg6[%105, %c0_39, %c0_40] : memref<6x8x8xbf16, #tpu.memory_space<vmem>>, vector<1x8x8xbf16>
      %107 = vector.shape_cast %106 : vector<1x8x8xbf16> to vector<8x8xbf16>
      %cst_41 = arith.constant dense<0.000000e+00> : vector<64x8xf32>
      %108 = tpu.matmul %104, %107, %cst_41 {dimension_numbers = #tpu.dot_dimension_numbers<[1], [0], [0], [1], [0, 0, 1, 1], [], []>} : vector<64x8xbf16>, vector<8x8xbf16>, vector<64x8xf32> -> vector<64x8xf32>
      %109 = arith.index_cast %arg11 : i32 to index
      %c0_42 = arith.constant 0 : index
      %c0_43 = arith.constant 0 : index
      %110 = vector.load %arg7[%109, %c0_42, %c0_43] : memref<6x1x8xf32, #tpu.memory_space<vmem>>, vector<1x1x8xf32>
      %111 = vector.shape_cast %110 : vector<1x1x8xf32> to vector<1x8xf32>
      %112 = vector.broadcast %111 : vector<1x8xf32> to vector<64x8xf32>
      %113 = arith.addf %108, %112 : vector<64x8xf32>
      %cst_44 = arith.constant 0.000000e+00 : f32
      %114 = vector.broadcast %cst_44 : f32 to vector<64x8xf32>
      %115 = arith.maximumf %113, %114 : vector<64x8xf32>
      %116 = arith.addf %72, %115 : vector<64x8xf32>
      scf.yield %116 : vector<64x8xf32>
    }
    %c6_i32_4 = arith.constant 6 : i32
    %13 = arith.truncf %12 : vector<64x8xf32> to vector<64x8xbf16>
    %c0_5 = arith.constant 0 : index
    %c0_6 = arith.constant 0 : index
    %14 = vector.load %arg8[%c0_5, %c0_6] : memref<8x8xbf16, #tpu.memory_space<vmem>>, vector<8x8xbf16>
    %cst = arith.constant dense<0.000000e+00> : vector<64x8xf32>
    %15 = tpu.matmul %13, %14, %cst {dimension_numbers = #tpu.dot_dimension_numbers<[1], [0], [0], [1], [0, 0, 1, 1], [], []>} : vector<64x8xbf16>, vector<8x8xbf16>, vector<64x8xf32> -> vector<64x8xf32>
    %c0_7 = arith.constant 0 : index
    %c0_8 = arith.constant 0 : index
    %16 = vector.load %arg9[%c0_7, %c0_8] : memref<1x8xf32, #tpu.memory_space<vmem>>, vector<1x8xf32>
    %17 = vector.broadcast %16 : vector<1x8xf32> to vector<64x8xf32>
    %18 = arith.addf %15, %17 : vector<64x8xf32>
    %19 = vector.shape_cast %18 : vector<64x8xf32> to vector<8x8x8xf32>
    %c0_9 = arith.constant 0 : index
    %c0_10 = arith.constant 0 : index
    %c0_11 = arith.constant 0 : index
    %20 = vector.load %arg10[%c0_9, %c0_10, %c0_11] : memref<8x8x8xf32, #tpu.memory_space<vmem>>, vector<8x8x8xf32>
    tpu.vector_store %arg10[%c0_9, %c0_10, %c0_11], %19 {strides = array<i32>} : memref<8x8x8xf32, #tpu.memory_space<vmem>>, vector<8x8x8xf32>,
    return
  }
  func.func @transform_0(%arg0: i32) -> (i32, i32, i32) {
    %c0_i32 = arith.constant 0 : i32
    %c0_i32_0 = arith.constant 0 : i32
    %c0_i32_1 = arith.constant 0 : i32
    return %arg0, %c0_i32, %c0_i32_0 : i32, i32, i32
  }
  func.func @transform_1(%arg0: i32) -> (i32, i32) {
    %c0_i32 = arith.constant 0 : i32
    %c0_i32_0 = arith.constant 0 : i32
    %c0_i32_1 = arith.constant 0 : i32
    return %c0_i32, %c0_i32_0 : i32, i32
  }
  func.func @transform_2(%arg0: i32) -> (i32, i32, i32) {
    %c0_i32 = arith.constant 0 : i32
    %c0_i32_0 = arith.constant 0 : i32
    %c0_i32_1 = arith.constant 0 : i32
    %c0_i32_2 = arith.constant 0 : i32
    return %c0_i32, %c0_i32_0, %c0_i32_1 : i32, i32, i32
  }
  func.func @transform_3(%arg0: i32) -> (i32, i32, i32) {
    %c0_i32 = arith.constant 0 : i32
    %c0_i32_0 = arith.constant 0 : i32
    %c0_i32_1 = arith.constant 0 : i32
    %c0_i32_2 = arith.constant 0 : i32
    return %c0_i32, %c0_i32_0, %c0_i32_1 : i32, i32, i32
  }
  func.func @transform_4(%arg0: i32) -> (i32, i32, i32) {
    %c0_i32 = arith.constant 0 : i32
    %c0_i32_0 = arith.constant 0 : i32
    %c0_i32_1 = arith.constant 0 : i32
    %c0_i32_2 = arith.constant 0 : i32
    return %c0_i32, %c0_i32_0, %c0_i32_1 : i32, i32, i32
  }
  func.func @transform_5(%arg0: i32) -> (i32, i32, i32) {
    %c0_i32 = arith.constant 0 : i32
    %c0_i32_0 = arith.constant 0 : i32
    %c0_i32_1 = arith.constant 0 : i32
    %c0_i32_2 = arith.constant 0 : i32
    return %c0_i32, %c0_i32_0, %c0_i32_1 : i32, i32, i32
  }
  func.func @transform_6(%arg0: i32) -> (i32, i32, i32) {
    %c0_i32 = arith.constant 0 : i32
    %c0_i32_0 = arith.constant 0 : i32
    %c0_i32_1 = arith.constant 0 : i32
    %c0_i32_2 = arith.constant 0 : i32
    return %c0_i32, %c0_i32_0, %c0_i32_1 : i32, i32, i32
  }
  func.func @transform_7(%arg0: i32) -> (i32, i32) {
    %c0_i32 = arith.constant 0 : i32
    %c0_i32_0 = arith.constant 0 : i32
    %c0_i32_1 = arith.constant 0 : i32
    return %c0_i32, %c0_i32_0 : i32, i32
  }
  func.func @transform_8(%arg0: i32) -> (i32, i32) {
    %c0_i32 = arith.constant 0 : i32
    %c0_i32_0 = arith.constant 0 : i32
    %c0_i32_1 = arith.constant 0 : i32
    return %c0_i32, %c0_i32_0 : i32, i32
  }
  func.func @transform_9(%arg0: i32) -> (i32, i32, i32) {
    %c0_i32 = arith.constant 0 : i32
    %c0_i32_0 = arith.constant 0 : i32
    %c0_i32_1 = arith.constant 0 : i32
    return %arg0, %c0_i32, %c0_i32_0 : i32, i32, i32
  }
}

</mosaic_0001>

<llo_original>
// kernel: tpu_custom_call.1
$region0: #{tpu_custom_call.1}
  #allocation0 [shape = 'u32[]', space=smem, size = 0x4, offset = 0x4, fixed_abs, tag = 'smem constant byte address 0x4 - core index']
  #allocation1 [shape = 'u32[144,128]{1,0:T(1,128)}', space=vmem, size = 0x12000, scoped, tag = 'internal scratch']
  %s0 = inlined_call_operand.hbm [shape: f32[8,8,8], index: 0, kind: input, shape index: {}]
  %s1 = inlined_call_operand.hbm [shape: f32[8,8], index: 1, kind: input, shape index: {}]
  %s2 = inlined_call_operand.hbm [shape: bf16[6,8,24], index: 2, kind: input, shape index: {}]
  %s3 = inlined_call_operand.hbm [shape: bf16[6,8,8], index: 3, kind: input, shape index: {}]
  %s4 = inlined_call_operand.vmem [shape: f32[6,1,8], index: 4, kind: input, shape index: {}]
  %s5 = inlined_call_operand.hbm [shape: bf16[6,8,8], index: 5, kind: input, shape index: {}]
  %s6 = inlined_call_operand.vmem [shape: f32[6,1,8], index: 6, kind: input, shape index: {}]
  %s7 = inlined_call_operand.vmem [shape: bf16[8,8], index: 7, kind: input, shape index: {}]
  %s8 = inlined_call_operand.vmem [shape: f32[1,8], index: 8, kind: input, shape index: {}]
  %s9 = inlined_call_operand.hbm [shape: f32[8,8,8], index: 9, kind: output, shape index: {}]
  %s10 = sld [smem:[#allocation0]]
  $region73: #{tpu_custom_call.1} parent=0
    _
  %s12 = ssub.s32 1, %s10
  %s13 = scalar_select 0, %s12, %s10
  $region1: #{tpu_custom_call.1} parent=0
    #allocation2 [shape = 'u8[32768]{0}', space=vmem, size = 0x8000, scoped, tag = 'input window, operand 0, single buffered']
    #allocation3 [shape = 's32[1]{0}', space=sflag, size = 0x4, scoped, tag = 'scoped memory for tpu_custom_call.1']
    #allocation4 [shape = 's32[1]{0}', space=sflag, size = 0x4, scoped, tag = 'scoped memory for tpu_custom_call.1']
    #allocation5 [shape = 'u8[4096]{0}', space=vmem, size = 0x1000, scoped, tag = 'input window, operand 1, single buffered']
    #allocation6 [shape = 's32[1]{0}', space=sflag, size = 0x4, scoped, tag = 'scoped memory for tpu_custom_call.1']
    #allocation7 [shape = 'u8[12288]{0}', space=vmem, size = 0x3000, scoped, tag = 'input window, operand 2, single buffered']
    #allocation8 [shape = 'u8[12288]{0}', space=vmem, size = 0x3000, scoped, tag = 'input window, operand 3, single buffered']
    #allocation9 [shape = 's32[1]{0}', space=sflag, size = 0x4, scoped, tag = 'scoped memory for tpu_custom_call.1']
    #allocation10 [shape = 'u8[12288]{0}', space=vmem, size = 0x3000, scoped, tag = 'input window, operand 5, single buffered']
    #allocation11 [shape = 'u8[32768]{0}', space=vmem, size = 0x8000, scoped, tag = 'output window, operand 0, single buffered']
    %14 = vsyncpa [#allocation3], 0
    %15 = vsyncpa [#allocation6], 0
    %16 = vsyncpa [#allocation9], 0
    %17 = vsyncpa [#allocation4], 0
    // Predicated region
    $region2: #{tpu_custom_call.1} parent=1 // pred_check
      _
    $region3: #{tpu_custom_call.1} parent=1 // pred_check_branch
      %19 = sbr.rel (0) target = $region5
    $region4: #{tpu_custom_call.1} parent=1 // pred_region
      %s21 = ssub.s32 1024, 1024
      %22 = vsyncadd [#allocation3], %s21
      %s23 = sshll.u32 [#allocation2], 4
      %s24 = int_to_ptr.vmem [resolvable:$true] %s23
      %29 = dma.hbm_to_vmem [thread:$0]  %s0, 1024, %s24, [#allocation3], 128, 128, 8
    $region5: #{tpu_custom_call.1} parent=1 // pred_fallthru
      _
    // Predicated region
    $region6: #{tpu_custom_call.1} parent=1 // pred_check
      _
    $region7: #{tpu_custom_call.1} parent=1 // pred_check_branch
      %31 = sbr.rel (0) target = $region9
    $region8: #{tpu_custom_call.1} parent=1 // pred_region
      %s33 = ssub.s32 128, 128
      %34 = vsyncadd [#allocation6], %s33
      %s36 = sshll.u32 [#allocation5], 4
      %s37 = int_to_ptr.vmem [resolvable:$true] %s36
      %39 = dma.hbm_to_vmem [thread:$0]  %s1, 128, %s37, [#allocation6]
    $region9: #{tpu_custom_call.1} parent=1 // pred_fallthru
      _
    // Predicated region
    $region10: #{tpu_custom_call.1} parent=1 // pred_check
      _
    $region11: #{tpu_custom_call.1} parent=1 // pred_check_branch
      %41 = sbr.rel (0) target = $region13
    $region12: #{tpu_custom_call.1} parent=1 // pred_region
      %s43 = ssub.s32 384, 384
      %44 = vsyncadd [#allocation6], %s43
      %s45 = sshll.u32 [#allocation7], 4
      %s46 = int_to_ptr.vmem [resolvable:$true] %s45
      %51 = dma.hbm_to_vmem [thread:$0]  %s2, 384, %s46, [#allocation6], 64, 64, 4
    $region13: #{tpu_custom_call.1} parent=1 // pred_fallthru
      _
    // Predicated region
    $region14: #{tpu_custom_call.1} parent=1 // pred_check
      _
    $region15: #{tpu_custom_call.1} parent=1 // pred_check_branch
      %53 = sbr.rel (0) target = $region17
    $region16: #{tpu_custom_call.1} parent=1 // pred_region
      %s55 = ssub.s32 384, 384
      %56 = vsyncadd [#allocation9], %s55
      %s57 = sshll.u32 [#allocation8], 4
      %s58 = int_to_ptr.vmem [resolvable:$true] %s57
      %63 = dma.hbm_to_vmem [thread:$0]  %s3, 384, %s58, [#allocation9], 64, 64, 4
    $region17: #{tpu_custom_call.1} parent=1 // pred_fallthru
      _
    // Predicated region
    $region18: #{tpu_custom_call.1} parent=1 // pred_check
      _
    $region19: #{tpu_custom_call.1} parent=1 // pred_check_branch
      %65 = sbr.rel (0) target = $region21
    $region20: #{tpu_custom_call.1} parent=1 // pred_region
      _
    $region21: #{tpu_custom_call.1} parent=1 // pred_fallthru
      _
    // Predicated region
    $region22: #{tpu_custom_call.1} parent=1 // pred_check
      _
    $region23: #{tpu_custom_call.1} parent=1 // pred_check_branch
      %67 = sbr.rel (0) target = $region25
    $region24: #{tpu_custom_call.1} parent=1 // pred_region
      %s69 = ssub.s32 384, 384
      %70 = vsyncadd [#allocation9], %s69
      %s71 = sshll.u32 [#allocation10], 4
      %s72 = int_to_ptr.vmem [resolvable:$true] %s71
      %77 = dma.hbm_to_vmem [thread:$0]  %s5, 384, %s72, [#allocation9], 64, 64, 4
    $region25: #{tpu_custom_call.1} parent=1 // pred_fallthru
      _
    // Predicated region
    $region26: #{tpu_custom_call.1} parent=1 // pred_check
      _
    $region27: #{tpu_custom_call.1} parent=1 // pred_check_branch
      %79 = sbr.rel (0) target = $region29
    $region28: #{tpu_custom_call.1} parent=1 // pred_region
      _
    $region29: #{tpu_custom_call.1} parent=1 // pred_fallthru
      _
    // Predicated region
    $region30: #{tpu_custom_call.1} parent=1 // pred_check
      _
    $region31: #{tpu_custom_call.1} parent=1 // pred_check_branch
      %81 = sbr.rel (0) target = $region33
    $region32: #{tpu_custom_call.1} parent=1 // pred_region
      _
    $region33: #{tpu_custom_call.1} parent=1 // pred_fallthru
      _
    // Predicated region
    $region34: #{tpu_custom_call.1} parent=1 // pred_check
      _
    $region35: #{tpu_custom_call.1} parent=1 // pred_check_branch
      %83 = sbr.rel (0) target = $region37
    $region36: #{tpu_custom_call.1} parent=1 // pred_region
      _
    $region37: #{tpu_custom_call.1} parent=1 // pred_fallthru
      _
    // Predicated region
    $region38: #{tpu_custom_call.1} parent=1 // pred_check
      _
    $region39: #{tpu_custom_call.1} parent=1 // pred_check_branch
      %85 = sbr.rel (0) target = $region41
    $region40: #{tpu_custom_call.1} parent=1 // pred_region
      %86 = dma.done [#allocation3], 1024
    $region41: #{tpu_custom_call.1} parent=1 // pred_fallthru
      _
    // Predicated region
    $region42: #{tpu_custom_call.1} parent=1 // pred_check
      _
    $region43: #{tpu_custom_call.1} parent=1 // pred_check_branch
      %88 = sbr.rel (0) target = $region45
    $region44: #{tpu_custom_call.1} parent=1 // pred_region
      %89 = dma.done [#allocation6], 128
    $region45: #{tpu_custom_call.1} parent=1 // pred_fallthru
      _
    // Predicated region
    $region46: #{tpu_custom_call.1} parent=1 // pred_check
      _
    $region47: #{tpu_custom_call.1} parent=1 // pred_check_branch
      %91 = sbr.rel (0) target = $region49
    $region48: #{tpu_custom_call.1} parent=1 // pred_region
      %92 = dma.done [#allocation6], 384
    $region49: #{tpu_custom_call.1} parent=1 // pred_fallthru
      _
    // Predicated region
    $region50: #{tpu_custom_call.1} parent=1 // pred_check
      _
    $region51: #{tpu_custom_call.1} parent=1 // pred_check_branch
      %94 = sbr.rel (0) target = $region53
    $region52: #{tpu_custom_call.1} parent=1 // pred_region
      %95 = dma.done [#allocation9], 384
    $region53: #{tpu_custom_call.1} parent=1 // pred_fallthru
      _
    // Predicated region
    $region54: #{tpu_custom_call.1} parent=1 // pred_check
      _
    $region55: #{tpu_custom_call.1} parent=1 // pred_check_branch
      %97 = sbr.rel (0) target = $region57
    $region56: #{tpu_custom_call.1} parent=1 // pred_region
      %98 = dma.done [#allocation9], 384
    $region57: #{tpu_custom_call.1} parent=1 // pred_fallthru
      _
    %v100 = vld [vmem:[#allocation2] sm:$0xff]
    %v101 = vld [vmem:[#allocation2 + $0x8] sm:$0xff]
    %v102 = vld [vmem:[#allocation2 + $0x10] sm:$0xff]
    %v103 = vld [vmem:[#allocation2 + $0x18] sm:$0xff]
    %v104 = vld [vmem:[#allocation2 + $0x20] sm:$0xff]
    %v105 = vld [vmem:[#allocation2 + $0x28] sm:$0xff]
    %v106 = vld [vmem:[#allocation2 + $0x30] sm:$0xff]
    %v107 = vld [vmem:[#allocation2 + $0x38] sm:$0xff]
    %v108 = vld [vmem:[#allocation5] sm:$0xff]
    %v109 = vadd.f32 %v100, %v108
    %v110 = vadd.f32 %v101, %v108
    %v111 = vadd.f32 %v102, %v108
    %v112 = vadd.f32 %v103, %v108
    %v113 = vadd.f32 %v104, %v108
    %v114 = vadd.f32 %v105, %v108
    %v115 = vadd.f32 %v106, %v108
    %v116 = vadd.f32 %v107, %v108
    %v117 = vadd.f32 %v100, %v109
    %v118 = vadd.f32 %v101, %v110
    %v119 = vadd.f32 %v102, %v111
    %v120 = vadd.f32 %v103, %v112
    %v121 = vadd.f32 %v104, %v113
    %v122 = vadd.f32 %v105, %v114
    %v123 = vadd.f32 %v106, %v115
    %v124 = vadd.f32 %v107, %v116
    %v125 = vlaneseq
    %v126 = vshrl.u32 %v125, 7
    %v127 = vlaneseq
    %v128 = vand.u32 %v127, 127
    %vm129 = vcmp.ge.s32.totalorder %v126, %v128
    loop: start=0, step=1, limit=6
    $region58: #{tpu_custom_call.1} parent=1 // loop_pre_header
      _
    $region59: #{tpu_custom_call.1} parent=1 // loop_header
      %s131 = sphi 0, %s135
      %p132 = scmp.ge.s32.totalorder %s131, 6
      %v136 = vphi %v117, %v1674
      %v137 = vphi %v118, %v1675
      %v138 = vphi %v119, %v1676
      %v139 = vphi %v120, %v1677
      %v140 = vphi %v121, %v1678
      %v141 = vphi %v122, %v1679
      %v142 = vphi %v123, %v1680
      %v143 = vphi %v124, %v1681
    $region60: #{tpu_custom_call.1} parent=1 // loop_header_branch
      %134 = sbr.rel (%p132) target = $region64
    $region61: #{tpu_custom_call.1} parent=1 // loop_body
      %vm144 = vcmask 64512
      %v145 = vsel %vm144, %v136, 0.0
      %146 = vadd.xlane.f32.xlu0 %v145
      %v147 = vpop.xlane.xlu0 %146
      %v148 = vsel %vm144, %v137, 0.0
      %149 = vadd.xlane.f32.xlu0 %v148
      %v150 = vpop.xlane.xlu0 %149
      %v151 = vsel %vm144, %v138, 0.0
      %152 = vadd.xlane.f32.xlu0 %v151
      %v153 = vpop.xlane.xlu0 %152
      %v154 = vsel %vm144, %v139, 0.0
      %155 = vadd.xlane.f32.xlu0 %v154
      %v156 = vpop.xlane.xlu0 %155
      %v157 = vsel %vm144, %v140, 0.0
      %158 = vadd.xlane.f32.xlu0 %v157
      %v159 = vpop.xlane.xlu0 %158
      %v160 = vsel %vm144, %v141, 0.0
      %161 = vadd.xlane.f32.xlu0 %v160
      %v162 = vpop.xlane.xlu0 %161
      %v163 = vsel %vm144, %v142, 0.0
      %164 = vadd.xlane.f32.xlu0 %v163
      %v165 = vpop.xlane.xlu0 %164
      %v166 = vsel %vm144, %v143, 0.0
      %167 = vadd.xlane.f32.xlu0 %v166
      %v168 = vpop.xlane.xlu0 %167
      %v169 = vrcp.pop 8.0
      %v170 = vmul.f32 %v147, %v169
      %v171 = vmul.f32 %v150, %v169
      %v172 = vmul.f32 %v153, %v169
      %v173 = vmul.f32 %v156, %v169
      %v174 = vmul.f32 %v159, %v169
      %v175 = vmul.f32 %v162, %v169
      %v176 = vmul.f32 %v165, %v169
      %v177 = vmul.f32 %v168, %v169
      %v178 = vsub.f32 %v136, %v170
      %v179 = vsub.f32 %v137, %v171
      %v180 = vsub.f32 %v138, %v172
      %v181 = vsub.f32 %v139, %v173
      %v182 = vsub.f32 %v140, %v174
      %v183 = vsub.f32 %v141, %v175
      %v184 = vsub.f32 %v142, %v176
      %v185 = vsub.f32 %v143, %v177
      %v186 = vmul.f32 %v178, %v178
      %v187 = vmul.f32 %v179, %v179
      %v188 = vmul.f32 %v180, %v180
      %v189 = vmul.f32 %v181, %v181
      %v190 = vmul.f32 %v182, %v182
      %v191 = vmul.f32 %v183, %v183
      %v192 = vmul.f32 %v184, %v184
      %v193 = vmul.f32 %v185, %v185
      %v194 = vsel %vm144, %v186, 0.0
      %195 = vadd.xlane.f32.xlu0 %v194
      %v196 = vpop.xlane.xlu0 %195
      %v197 = vsel %vm144, %v187, 0.0
      %198 = vadd.xlane.f32.xlu0 %v197
      %v199 = vpop.xlane.xlu0 %198
      %v200 = vsel %vm144, %v188, 0.0
      %201 = vadd.xlane.f32.xlu0 %v200
      %v202 = vpop.xlane.xlu0 %201
      %v203 = vsel %vm144, %v189, 0.0
      %204 = vadd.xlane.f32.xlu0 %v203
      %v205 = vpop.xlane.xlu0 %204
      %v206 = vsel %vm144, %v190, 0.0
      %207 = vadd.xlane.f32.xlu0 %v206
      %v208 = vpop.xlane.xlu0 %207
      %v209 = vsel %vm144, %v191, 0.0
      %210 = vadd.xlane.f32.xlu0 %v209
      %v211 = vpop.xlane.xlu0 %210
      %v212 = vsel %vm144, %v192, 0.0
      %213 = vadd.xlane.f32.xlu0 %v212
      %v214 = vpop.xlane.xlu0 %213
      %v215 = vsel %vm144, %v193, 0.0
      %216 = vadd.xlane.f32.xlu0 %v215
      %v217 = vpop.xlane.xlu0 %216
      %v218 = vmul.f32 %v196, 0.14285715
      %v219 = vmul.f32 %v199, 0.14285715
      %v220 = vmul.f32 %v202, 0.14285715
      %v221 = vmul.f32 %v205, 0.14285715
      %v222 = vmul.f32 %v208, 0.14285715
      %v223 = vmul.f32 %v211, 0.14285715
      %v224 = vmul.f32 %v214, 0.14285715
      %v225 = vmul.f32 %v217, 0.14285715
      %v226 = vrsqrt.pop %v218
      %v227 = vmul.f32 %v218, %v226
      %vm228 = vcmp.eq.f32.partialorder %v218, inf
      %v229 = vsel %vm228, %v218, %v227
      %vm230 = vcmp.eq.f32.partialorder %v218, 0.0
      %v231 = vand.u32 %v218, 2147483648
      %v232 = vsel %vm230, %v231, %v229
      %v233 = vrsqrt.pop %v219
      %v234 = vmul.f32 %v219, %v233
      %vm235 = vcmp.eq.f32.partialorder %v219, inf
      %v236 = vsel %vm235, %v219, %v234
      %vm237 = vcmp.eq.f32.partialorder %v219, 0.0
      %v238 = vand.u32 %v219, 2147483648
      %v239 = vsel %vm237, %v238, %v236
      %v240 = vrsqrt.pop %v220
      %v241 = vmul.f32 %v220, %v240
      %vm242 = vcmp.eq.f32.partialorder %v220, inf
      %v243 = vsel %vm242, %v220, %v241
      %vm244 = vcmp.eq.f32.partialorder %v220, 0.0
      %v245 = vand.u32 %v220, 2147483648
      %v246 = vsel %vm244, %v245, %v243
      %v247 = vrsqrt.pop %v221
      %v248 = vmul.f32 %v221, %v247
      %vm249 = vcmp.eq.f32.partialorder %v221, inf
      %v250 = vsel %vm249, %v221, %v248
      %vm251 = vcmp.eq.f32.partialorder %v221, 0.0
      %v252 = vand.u32 %v221, 2147483648
      %v253 = vsel %vm251, %v252, %v250
      %v254 = vrsqrt.pop %v222
      %v255 = vmul.f32 %v222, %v254
      %vm256 = vcmp.eq.f32.partialorder %v222, inf
      %v257 = vsel %vm256, %v222, %v255
      %vm258 = vcmp.eq.f32.partialorder %v222, 0.0
      %v259 = vand.u32 %v222, 2147483648
      %v260 = vsel %vm258, %v259, %v257
      %v261 = vrsqrt.pop %v223
      %v262 = vmul.f32 %v223, %v261
      %vm263 = vcmp.eq.f32.partialorder %v223, inf
      %v264 = vsel %vm263, %v223, %v262
      %vm265 = vcmp.eq.f32.partialorder %v223, 0.0
      %v266 = vand.u32 %v223, 2147483648
      %v267 = vsel %vm265, %v266, %v264
      %v268 = vrsqrt.pop %v224
      %v269 = vmul.f32 %v224, %v268
      %vm270 = vcmp.eq.f32.partialorder %v224, inf
      %v271 = vsel %vm270, %v224, %v269
      %vm272 = vcmp.eq.f32.partialorder %v224, 0.0
      %v273 = vand.u32 %v224, 2147483648
      %v274 = vsel %vm272, %v273, %v271
      %v275 = vrsqrt.pop %v225
      %v276 = vmul.f32 %v225, %v275
      %vm277 = vcmp.eq.f32.partialorder %v225, inf
      %v278 = vsel %vm277, %v225, %v276
      %vm279 = vcmp.eq.f32.partialorder %v225, 0.0
      %v280 = vand.u32 %v225, 2147483648
      %v281 = vsel %vm279, %v280, %v278
      %v282 = vadd.f32 %v232, 1e-06
      %v283 = vadd.f32 %v239, 1e-06
      %v284 = vadd.f32 %v246, 1e-06
      %v285 = vadd.f32 %v253, 1e-06
      %v286 = vadd.f32 %v260, 1e-06
      %v287 = vadd.f32 %v267, 1e-06
      %v288 = vadd.f32 %v274, 1e-06
      %v289 = vadd.f32 %v281, 1e-06
      %v290 = vrcp.pop %v282
      %v291 = vrcp.pop %v283
      %v292 = vrcp.pop %v284
      %v293 = vrcp.pop %v285
      %v294 = vrcp.pop %v286
      %v295 = vrcp.pop %v287
      %v296 = vrcp.pop %v288
      %v297 = vrcp.pop %v289
      %v298 = vmul.f32 %v178, %v290
      %v299 = vmul.f32 %v179, %v291
      %v300 = vmul.f32 %v180, %v292
      %v301 = vmul.f32 %v181, %v293
      %v302 = vmul.f32 %v182, %v294
      %v303 = vmul.f32 %v183, %v295
      %v304 = vmul.f32 %v184, %v296
      %v305 = vmul.f32 %v185, %v297
      %v306 = vadd.f32 %v298, 1.0
      %v307 = vadd.f32 %v299, 1.0
      %v308 = vadd.f32 %v300, 1.0
      %v309 = vadd.f32 %v301, 1.0
      %v310 = vadd.f32 %v302, 1.0
      %v311 = vadd.f32 %v303, 1.0
      %v312 = vadd.f32 %v304, 1.0
      %v313 = vadd.f32 %v305, 1.0
      %v314 = vpack.c.bf16 %v307, %v306
      %v315 = vpack.c.bf16 %v309, %v308
      %v316 = vpack.c.bf16 %v311, %v310
      %v317 = vpack.c.bf16 %v313, %v312
      %s318 = smul.addr %s131, 4
      %s319 = scalar_lea.vmem [#allocation7], %s318
      %v320 = vld [vmem:[%s319] sm:$0xf]
      %v322 = vsel %vm144, %v314, 0
      %v325 = vsel %vm144, %v315, 0
      %v328 = vsel %vm144, %v316, 0
      %v331 = vsel %vm144, %v317, 0
      %vm333 = vcmask 1043456
      %v335 = vsel %vm333, %v320, 0
      %337 = vmatprep.subr.bf16.mxu0 0
      %338 = vmatpush1.bf16.msra.mxu0 %v335
      %339 = vmatprep.subr.bf16.mxu0 0
      %340 = vmatpush1.bf16.msra.mxu0 0
      %341 = vmatprep.subr.bf16.mxu0 0
      %342 = vmatpush1.bf16.msra.mxu0 0
      %343 = vmatprep.subr.bf16.mxu0 0
      %344 = vmatpush1.bf16.msra.mxu0 0
      %345 = vmatprep.subr.bf16.mxu0 0
      %346 = vmatpush1.bf16.msra.mxu0 0
      %347 = vmatprep.subr.bf16.mxu0 0
      %348 = vmatpush1.bf16.msra.mxu0 0
      %349 = vmatprep.subr.bf16.mxu0 0
      %350 = vmatpush1.bf16.msra.mxu0 0
      %351 = vmatprep.subr.bf16.mxu0 0
      %352 = vmatpush1.bf16.msra.mxu0 0
      %353 = vmatprep.subr.bf16.mxu0 0
      %354 = vmatpush1.bf16.msra.mxu0 0
      %355 = vmatprep.subr.bf16.mxu0 0
      %356 = vmatpush1.bf16.msra.mxu0 0
      %357 = vmatprep.subr.bf16.mxu0 0
      %358 = vmatpush1.bf16.msra.mxu0 0
      %359 = vmatprep.subr.bf16.mxu0 0
      %360 = vmatpush1.bf16.msra.mxu0 0
      %361 = vmatprep.subr.bf16.mxu0 0
      %362 = vmatpush1.bf16.msra.mxu0 0
      %363 = vmatprep.subr.bf16.mxu0 0
      %364 = vmatpush1.bf16.msra.mxu0 0
      %365 = vmatprep.subr.bf16.mxu0 0
      %366 = vmatpush1.bf16.msra.mxu0 0
      %367 = vmatprep.subr.bf16.mxu0 0
      %368 = vmatpush1.bf16.msra.mxu0 0
      %369 = vmatprep.mubr.bf16.mxu0 0
      %370 = vmatmul.mubr.bf16.gmra.mrb[0].mxu0 %v322
      %v371 = vpop.f32.mrb[0].mxu0
      %v372 = vadd.f32 0.0, %v371
      %v373 = vpop.f32.mrb[0].mxu0
      %v374 = vpop.f32.mrb[0].mxu0
      %v375 = vadd.f32 0.0, %v374
      %v376 = vpop.f32.mrb[0].mxu0
      %377 = vmatprep.mubr.bf16.mxu0 0
      %378 = vmatmul.mubr.bf16.gmra.mrb[0].mxu0 %v325
      %v379 = vpop.f32.mrb[0].mxu0
      %v380 = vadd.f32 0.0, %v379
      %v381 = vpop.f32.mrb[0].mxu0
      %v382 = vpop.f32.mrb[0].mxu0
      %v383 = vadd.f32 0.0, %v382
      %v384 = vpop.f32.mrb[0].mxu0
      %385 = vmatprep.mubr.bf16.mxu0 0
      %386 = vmatmul.mubr.bf16.gmra.mrb[0].mxu0 %v328
      %v387 = vpop.f32.mrb[0].mxu0
      %v388 = vadd.f32 0.0, %v387
      %v389 = vpop.f32.mrb[0].mxu0
      %v390 = vpop.f32.mrb[0].mxu0
      %v391 = vadd.f32 0.0, %v390
      %v392 = vpop.f32.mrb[0].mxu0
      %393 = vmatprep.mubr.bf16.mxu0 0
      %394 = vmatmul.mubr.bf16.gmra.mrb[0].mxu0 %v331
      %v395 = vpop.f32.mrb[0].mxu0
      %v396 = vadd.f32 0.0, %v395
      %v397 = vpop.f32.mrb[0].mxu0
      %v398 = vpop.f32.mrb[0].mxu0
      %v399 = vadd.f32 0.0, %v398
      %v400 = vpop.f32.mrb[0].mxu0
      %401 = vdwg.mxu0
      %v402 = vpack.c.bf16 %v375, %v372
      %v403 = vpack.c.bf16 %v383, %v380
      %v404 = vpack.c.bf16 %v391, %v388
      %v405 = vpack.c.bf16 %v399, %v396
      %v410 = vunpack.c.l.b16 %v402
      %v411 = vunpack.c.h.b16 %v402
      %v412 = vunpack.c.l.b16 %v403
      %v413 = vunpack.c.h.b16 %v403
      %v414 = vunpack.c.l.b16 %v404
      %v415 = vunpack.c.h.b16 %v404
      %v416 = vunpack.c.l.b16 %v405
      %v417 = vunpack.c.h.b16 %v405
      %v418 = vpack.c.b16 %v410, %v410
      %v419 = vpack.c.b16 %v411, %v411
      %v420 = vpack.c.b16 %v412, %v412
      %v421 = vpack.c.b16 %v413, %v413
      %v422 = vpack.c.b16 %v414, %v414
      %v423 = vpack.c.b16 %v415, %v415
      %v424 = vpack.c.b16 %v416, %v416
      %v425 = vpack.c.b16 %v417, %v417
      %426 = vrot.lane.b32.xlu0 %v418, 120
      %v427 = vpop.permute.xlu0 %426
      %v429 = vsel %vm144, %v418, 0
      %v432 = vsel %vm144, %v427, 0
      %434 = vmatprep.subr.bf16.mxu0 0
      %435 = vmatpush1.bf16.xpose.msra.mxu0 %v432
      %436 = vmatprep.subr.bf16.mxu0 0
      %437 = vmatpush1.bf16.xpose.msra.mxu0 0
      %438 = vmatprep.subr.bf16.mxu0 0
      %439 = vmatpush1.bf16.xpose.msra.mxu0 0
      %440 = vmatprep.subr.bf16.mxu0 0
      %441 = vmatpush1.bf16.xpose.msra.mxu0 0
      %442 = vmatprep.subr.bf16.mxu0 0
      %443 = vmatpush1.bf16.xpose.msra.mxu0 0
      %444 = vmatprep.subr.bf16.mxu0 0
      %445 = vmatpush1.bf16.xpose.msra.mxu0 0
      %446 = vmatprep.subr.bf16.mxu0 0
      %447 = vmatpush1.bf16.xpose.msra.mxu0 0
      %448 = vmatprep.subr.bf16.mxu0 0
      %449 = vmatpush1.bf16.xpose.msra.mxu0 0
      %450 = vmatprep.subr.bf16.mxu0 0
      %451 = vmatpush1.bf16.xpose.msra.mxu0 0
      %452 = vmatprep.subr.bf16.mxu0 0
      %453 = vmatpush1.bf16.xpose.msra.mxu0 0
      %454 = vmatprep.subr.bf16.mxu0 0
      %455 = vmatpush1.bf16.xpose.msra.mxu0 0
      %456 = vmatprep.subr.bf16.mxu0 0
      %457 = vmatpush1.bf16.xpose.msra.mxu0 0
      %458 = vmatprep.subr.bf16.mxu0 0
      %459 = vmatpush1.bf16.xpose.msra.mxu0 0
      %460 = vmatprep.subr.bf16.mxu0 0
      %461 = vmatpush1.bf16.xpose.msra.mxu0 0
      %462 = vmatprep.subr.bf16.mxu0 0
      %463 = vmatpush1.bf16.xpose.msra.mxu0 0
      %464 = vmatprep.subr.bf16.mxu0 0
      %465 = vmatpush1.bf16.xpose.msra.mxu0 0
      %466 = vmatprep.mubr.bf16.mxu0 0
      %467 = vmatmul.mubr.bf16.gmra.mrb[0].mxu0 %v429
      %v468 = vpop.f32.mrb[0].mxu0
      %v469 = vadd.f32 0.0, %v468
      %v470 = vpop.f32.mrb[0].mxu0
      %v471 = vpop.f32.mrb[0].mxu0
      %v472 = vpop.f32.mrb[0].mxu0
      %473 = vdwg.mxu0
      %474 = vrot.lane.b32.xlu0 %v419, 120
      %v475 = vpop.permute.xlu0 %474
      %v477 = vsel %vm144, %v419, 0
      %v480 = vsel %vm144, %v475, 0
      %482 = vmatprep.subr.bf16.mxu0 0
      %483 = vmatpush1.bf16.xpose.msra.mxu0 %v480
      %484 = vmatprep.subr.bf16.mxu0 0
      %485 = vmatpush1.bf16.xpose.msra.mxu0 0
      %486 = vmatprep.subr.bf16.mxu0 0
      %487 = vmatpush1.bf16.xpose.msra.mxu0 0
      %488 = vmatprep.subr.bf16.mxu0 0
      %489 = vmatpush1.bf16.xpose.msra.mxu0 0
      %490 = vmatprep.subr.bf16.mxu0 0
      %491 = vmatpush1.bf16.xpose.msra.mxu0 0
      %492 = vmatprep.subr.bf16.mxu0 0
      %493 = vmatpush1.bf16.xpose.msra.mxu0 0
      %494 = vmatprep.subr.bf16.mxu0 0
      %495 = vmatpush1.bf16.xpose.msra.mxu0 0
      %496 = vmatprep.subr.bf16.mxu0 0
      %497 = vmatpush1.bf16.xpose.msra.mxu0 0
      %498 = vmatprep.subr.bf16.mxu0 0
      %499 = vmatpush1.bf16.xpose.msra.mxu0 0
      %500 = vmatprep.subr.bf16.mxu0 0
      %501 = vmatpush1.bf16.xpose.msra.mxu0 0
      %502 = vmatprep.subr.bf16.mxu0 0
      %503 = vmatpush1.bf16.xpose.msra.mxu0 0
      %504 = vmatprep.subr.bf16.mxu0 0
      %505 = vmatpush1.bf16.xpose.msra.mxu0 0
      %506 = vmatprep.subr.bf16.mxu0 0
      %507 = vmatpush1.bf16.xpose.msra.mxu0 0
      %508 = vmatprep.subr.bf16.mxu0 0
      %509 = vmatpush1.bf16.xpose.msra.mxu0 0
      %510 = vmatprep.subr.bf16.mxu0 0
      %511 = vmatpush1.bf16.xpose.msra.mxu0 0
      %512 = vmatprep.subr.bf16.mxu0 0
      %513 = vmatpush1.bf16.xpose.msra.mxu0 0
      %514 = vmatprep.mubr.bf16.mxu0 0
      %515 = vmatmul.mubr.bf16.gmra.mrb[0].mxu0 %v477
      %v516 = vpop.f32.mrb[0].mxu0
      %v517 = vadd.f32 0.0, %v516
      %v518 = vpop.f32.mrb[0].mxu0
      %v519 = vpop.f32.mrb[0].mxu0
      %v520 = vpop.f32.mrb[0].mxu0
      %521 = vdwg.mxu0
      %522 = vrot.lane.b32.xlu0 %v420, 120
      %v523 = vpop.permute.xlu0 %522
      %v525 = vsel %vm144, %v420, 0
      %v528 = vsel %vm144, %v523, 0
      %530 = vmatprep.subr.bf16.mxu0 0
      %531 = vmatpush1.bf16.xpose.msra.mxu0 %v528
      %532 = vmatprep.subr.bf16.mxu0 0
      %533 = vmatpush1.bf16.xpose.msra.mxu0 0
      %534 = vmatprep.subr.bf16.mxu0 0
      %535 = vmatpush1.bf16.xpose.msra.mxu0 0
      %536 = vmatprep.subr.bf16.mxu0 0
      %537 = vmatpush1.bf16.xpose.msra.mxu0 0
      %538 = vmatprep.subr.bf16.mxu0 0
      %539 = vmatpush1.bf16.xpose.msra.mxu0 0
      %540 = vmatprep.subr.bf16.mxu0 0
      %541 = vmatpush1.bf16.xpose.msra.mxu0 0
      %542 = vmatprep.subr.bf16.mxu0 0
      %543 = vmatpush1.bf16.xpose.msra.mxu0 0
      %544 = vmatprep.subr.bf16.mxu0 0
      %545 = vmatpush1.bf16.xpose.msra.mxu0 0
      %546 = vmatprep.subr.bf16.mxu0 0
      %547 = vmatpush1.bf16.xpose.msra.mxu0 0
      %548 = vmatprep.subr.bf16.mxu0 0
      %549 = vmatpush1.bf16.xpose.msra.mxu0 0
      %550 = vmatprep.subr.bf16.mxu0 0
      %551 = vmatpush1.bf16.xpose.msra.mxu0 0
      %552 = vmatprep.subr.bf16.mxu0 0
      %553 = vmatpush1.bf16.xpose.msra.mxu0 0
      %554 = vmatprep.subr.bf16.mxu0 0
      %555 = vmatpush1.bf16.xpose.msra.mxu0 0
      %556 = vmatprep.subr.bf16.mxu0 0
      %557 = vmatpush1.bf16.xpose.msra.mxu0 0
      %558 = vmatprep.subr.bf16.mxu0 0
      %559 = vmatpush1.bf16.xpose.msra.mxu0 0
      %560 = vmatprep.subr.bf16.mxu0 0
      %561 = vmatpush1.bf16.xpose.msra.mxu0 0
      %562 = vmatprep.mubr.bf16.mxu0 0
      %563 = vmatmul.mubr.bf16.gmra.mrb[0].mxu0 %v525
      %v564 = vpop.f32.mrb[0].mxu0
      %v565 = vadd.f32 0.0, %v564
      %v566 = vpop.f32.mrb[0].mxu0
      %v567 = vpop.f32.mrb[0].mxu0
      %v568 = vpop.f32.mrb[0].mxu0
      %569 = vdwg.mxu0
      %570 = vrot.lane.b32.xlu0 %v421, 120
      %v571 = vpop.permute.xlu0 %570
      %v573 = vsel %vm144, %v421, 0
      %v576 = vsel %vm144, %v571, 0
      %578 = vmatprep.subr.bf16.mxu0 0
      %579 = vmatpush1.bf16.xpose.msra.mxu0 %v576
      %580 = vmatprep.subr.bf16.mxu0 0
      %581 = vmatpush1.bf16.xpose.msra.mxu0 0
      %582 = vmatprep.subr.bf16.mxu0 0
      %583 = vmatpush1.bf16.xpose.msra.mxu0 0
      %584 = vmatprep.subr.bf16.mxu0 0
      %585 = vmatpush1.bf16.xpose.msra.mxu0 0
      %586 = vmatprep.subr.bf16.mxu0 0
      %587 = vmatpush1.bf16.xpose.msra.mxu0 0
      %588 = vmatprep.subr.bf16.mxu0 0
      %589 = vmatpush1.bf16.xpose.msra.mxu0 0
      %590 = vmatprep.subr.bf16.mxu0 0
      %591 = vmatpush1.bf16.xpose.msra.mxu0 0
      %592 = vmatprep.subr.bf16.mxu0 0
      %593 = vmatpush1.bf16.xpose.msra.mxu0 0
      %594 = vmatprep.subr.bf16.mxu0 0
      %595 = vmatpush1.bf16.xpose.msra.mxu0 0
      %596 = vmatprep.subr.bf16.mxu0 0
      %597 = vmatpush1.bf16.xpose.msra.mxu0 0
      %598 = vmatprep.subr.bf16.mxu0 0
      %599 = vmatpush1.bf16.xpose.msra.mxu0 0
      %600 = vmatprep.subr.bf16.mxu0 0
      %601 = vmatpush1.bf16.xpose.msra.mxu0 0
      %602 = vmatprep.subr.bf16.mxu0 0
      %603 = vmatpush1.bf16.xpose.msra.mxu0 0
      %604 = vmatprep.subr.bf16.mxu0 0
      %605 = vmatpush1.bf16.xpose.msra.mxu0 0
      %606 = vmatprep.subr.bf16.mxu0 0
      %607 = vmatpush1.bf16.xpose.msra.mxu0 0
      %608 = vmatprep.subr.bf16.mxu0 0
      %609 = vmatpush1.bf16.xpose.msra.mxu0 0
      %610 = vmatprep.mubr.bf16.mxu0 0
      %611 = vmatmul.mubr.bf16.gmra.mrb[0].mxu0 %v573
      %v612 = vpop.f32.mrb[0].mxu0
      %v613 = vadd.f32 0.0, %v612
      %v614 = vpop.f32.mrb[0].mxu0
      %v615 = vpop.f32.mrb[0].mxu0
      %v616 = vpop.f32.mrb[0].mxu0
      %617 = vdwg.mxu0
      %618 = vrot.lane.b32.xlu0 %v422, 120
      %v619 = vpop.permute.xlu0 %618
      %v621 = vsel %vm144, %v422, 0
      %v624 = vsel %vm144, %v619, 0
      %626 = vmatprep.subr.bf16.mxu0 0
      %627 = vmatpush1.bf16.xpose.msra.mxu0 %v624
      %628 = vmatprep.subr.bf16.mxu0 0
      %629 = vmatpush1.bf16.xpose.msra.mxu0 0
      %630 = vmatprep.subr.bf16.mxu0 0
      %631 = vmatpush1.bf16.xpose.msra.mxu0 0
      %632 = vmatprep.subr.bf16.mxu0 0
      %633 = vmatpush1.bf16.xpose.msra.mxu0 0
      %634 = vmatprep.subr.bf16.mxu0 0
      %635 = vmatpush1.bf16.xpose.msra.mxu0 0
      %636 = vmatprep.subr.bf16.mxu0 0
      %637 = vmatpush1.bf16.xpose.msra.mxu0 0
      %638 = vmatprep.subr.bf16.mxu0 0
      %639 = vmatpush1.bf16.xpose.msra.mxu0 0
      %640 = vmatprep.subr.bf16.mxu0 0
      %641 = vmatpush1.bf16.xpose.msra.mxu0 0
      %642 = vmatprep.subr.bf16.mxu0 0
      %643 = vmatpush1.bf16.xpose.msra.mxu0 0
      %644 = vmatprep.subr.bf16.mxu0 0
      %645 = vmatpush1.bf16.xpose.msra.mxu0 0
      %646 = vmatprep.subr.bf16.mxu0 0
      %647 = vmatpush1.bf16.xpose.msra.mxu0 0
      %648 = vmatprep.subr.bf16.mxu0 0
      %649 = vmatpush1.bf16.xpose.msra.mxu0 0
      %650 = vmatprep.subr.bf16.mxu0 0
      %651 = vmatpush1.bf16.xpose.msra.mxu0 0
      %652 = vmatprep.subr.bf16.mxu0 0
      %653 = vmatpush1.bf16.xpose.msra.mxu0 0
      %654 = vmatprep.subr.bf16.mxu0 0
      %655 = vmatpush1.bf16.xpose.msra.mxu0 0
      %656 = vmatprep.subr.bf16.mxu0 0
      %657 = vmatpush1.bf16.xpose.msra.mxu0 0
      %658 = vmatprep.mubr.bf16.mxu0 0
      %659 = vmatmul.mubr.bf16.gmra.mrb[0].mxu0 %v621
      %v660 = vpop.f32.mrb[0].mxu0
      %v661 = vadd.f32 0.0, %v660
      %v662 = vpop.f32.mrb[0].mxu0
      %v663 = vpop.f32.mrb[0].mxu0
      %v664 = vpop.f32.mrb[0].mxu0
      %665 = vdwg.mxu0
      %666 = vrot.lane.b32.xlu0 %v423, 120
      %v667 = vpop.permute.xlu0 %666
      %v669 = vsel %vm144, %v423, 0
      %v672 = vsel %vm144, %v667, 0
      %674 = vmatprep.subr.bf16.mxu0 0
      %675 = vmatpush1.bf16.xpose.msra.mxu0 %v672
      %676 = vmatprep.subr.bf16.mxu0 0
      %677 = vmatpush1.bf16.xpose.msra.mxu0 0
      %678 = vmatprep.subr.bf16.mxu0 0
      %679 = vmatpush1.bf16.xpose.msra.mxu0 0
      %680 = vmatprep.subr.bf16.mxu0 0
      %681 = vmatpush1.bf16.xpose.msra.mxu0 0
      %682 = vmatprep.subr.bf16.mxu0 0
      %683 = vmatpush1.bf16.xpose.msra.mxu0 0
      %684 = vmatprep.subr.bf16.mxu0 0
      %685 = vmatpush1.bf16.xpose.msra.mxu0 0
      %686 = vmatprep.subr.bf16.mxu0 0
      %687 = vmatpush1.bf16.xpose.msra.mxu0 0
      %688 = vmatprep.subr.bf16.mxu0 0
      %689 = vmatpush1.bf16.xpose.msra.mxu0 0
      %690 = vmatprep.subr.bf16.mxu0 0
      %691 = vmatpush1.bf16.xpose.msra.mxu0 0
      %692 = vmatprep.subr.bf16.mxu0 0
      %693 = vmatpush1.bf16.xpose.msra.mxu0 0
      %694 = vmatprep.subr.bf16.mxu0 0
      %695 = vmatpush1.bf16.xpose.msra.mxu0 0
      %696 = vmatprep.subr.bf16.mxu0 0
      %697 = vmatpush1.bf16.xpose.msra.mxu0 0
      %698 = vmatprep.subr.bf16.mxu0 0
      %699 = vmatpush1.bf16.xpose.msra.mxu0 0
      %700 = vmatprep.subr.bf16.mxu0 0
      %701 = vmatpush1.bf16.xpose.msra.mxu0 0
      %702 = vmatprep.subr.bf16.mxu0 0
      %703 = vmatpush1.bf16.xpose.msra.mxu0 0
      %704 = vmatprep.subr.bf16.mxu0 0
      %705 = vmatpush1.bf16.xpose.msra.mxu0 0
      %706 = vmatprep.mubr.bf16.mxu0 0
      %707 = vmatmul.mubr.bf16.gmra.mrb[0].mxu0 %v669
      %v708 = vpop.f32.mrb[0].mxu0
      %v709 = vadd.f32 0.0, %v708
      %v710 = vpop.f32.mrb[0].mxu0
      %v711 = vpop.f32.mrb[0].mxu0
      %v712 = vpop.f32.mrb[0].mxu0
      %713 = vdwg.mxu0
      %714 = vrot.lane.b32.xlu0 %v424, 120
      %v715 = vpop.permute.xlu0 %714
      %v717 = vsel %vm144, %v424, 0
      %v720 = vsel %vm144, %v715, 0
      %722 = vmatprep.subr.bf16.mxu0 0
      %723 = vmatpush1.bf16.xpose.msra.mxu0 %v720
      %724 = vmatprep.subr.bf16.mxu0 0
      %725 = vmatpush1.bf16.xpose.msra.mxu0 0
      %726 = vmatprep.subr.bf16.mxu0 0
      %727 = vmatpush1.bf16.xpose.msra.mxu0 0
      %728 = vmatprep.subr.bf16.mxu0 0
      %729 = vmatpush1.bf16.xpose.msra.mxu0 0
      %730 = vmatprep.subr.bf16.mxu0 0
      %731 = vmatpush1.bf16.xpose.msra.mxu0 0
      %732 = vmatprep.subr.bf16.mxu0 0
      %733 = vmatpush1.bf16.xpose.msra.mxu0 0
      %734 = vmatprep.subr.bf16.mxu0 0
      %735 = vmatpush1.bf16.xpose.msra.mxu0 0
      %736 = vmatprep.subr.bf16.mxu0 0
      %737 = vmatpush1.bf16.xpose.msra.mxu0 0
      %738 = vmatprep.subr.bf16.mxu0 0
      %739 = vmatpush1.bf16.xpose.msra.mxu0 0
      %740 = vmatprep.subr.bf16.mxu0 0
      %741 = vmatpush1.bf16.xpose.msra.mxu0 0
      %742 = vmatprep.subr.bf16.mxu0 0
      %743 = vmatpush1.bf16.xpose.msra.mxu0 0
      %744 = vmatprep.subr.bf16.mxu0 0
      %745 = vmatpush1.bf16.xpose.msra.mxu0 0
      %746 = vmatprep.subr.bf16.mxu0 0
      %747 = vmatpush1.bf16.xpose.msra.mxu0 0
      %748 = vmatprep.subr.bf16.mxu0 0
      %749 = vmatpush1.bf16.xpose.msra.mxu0 0
      %750 = vmatprep.subr.bf16.mxu0 0
      %751 = vmatpush1.bf16.xpose.msra.mxu0 0
      %752 = vmatprep.subr.bf16.mxu0 0
      %753 = vmatpush1.bf16.xpose.msra.mxu0 0
      %754 = vmatprep.mubr.bf16.mxu0 0
      %755 = vmatmul.mubr.bf16.gmra.mrb[0].mxu0 %v717
      %v756 = vpop.f32.mrb[0].mxu0
      %v757 = vadd.f32 0.0, %v756
      %v758 = vpop.f32.mrb[0].mxu0
      %v759 = vpop.f32.mrb[0].mxu0
      %v760 = vpop.f32.mrb[0].mxu0
      %761 = vdwg.mxu0
      %762 = vrot.lane.b32.xlu0 %v425, 120
      %v763 = vpop.permute.xlu0 %762
      %v765 = vsel %vm144, %v425, 0
      %v768 = vsel %vm144, %v763, 0
      %770 = vmatprep.subr.bf16.mxu0 0
      %771 = vmatpush1.bf16.xpose.msra.mxu0 %v768
      %772 = vmatprep.subr.bf16.mxu0 0
      %773 = vmatpush1.bf16.xpose.msra.mxu0 0
      %774 = vmatprep.subr.bf16.mxu0 0
      %775 = vmatpush1.bf16.xpose.msra.mxu0 0
      %776 = vmatprep.subr.bf16.mxu0 0
      %777 = vmatpush1.bf16.xpose.msra.mxu0 0
      %778 = vmatprep.subr.bf16.mxu0 0
      %779 = vmatpush1.bf16.xpose.msra.mxu0 0
      %780 = vmatprep.subr.bf16.mxu0 0
      %781 = vmatpush1.bf16.xpose.msra.mxu0 0
      %782 = vmatprep.subr.bf16.mxu0 0
      %783 = vmatpush1.bf16.xpose.msra.mxu0 0
      %784 = vmatprep.subr.bf16.mxu0 0
      %785 = vmatpush1.bf16.xpose.msra.mxu0 0
      %786 = vmatprep.subr.bf16.mxu0 0
      %787 = vmatpush1.bf16.xpose.msra.mxu0 0
      %788 = vmatprep.subr.bf16.mxu0 0
      %789 = vmatpush1.bf16.xpose.msra.mxu0 0
      %790 = vmatprep.subr.bf16.mxu0 0
      %791 = vmatpush1.bf16.xpose.msra.mxu0 0
      %792 = vmatprep.subr.bf16.mxu0 0
      %793 = vmatpush1.bf16.xpose.msra.mxu0 0
      %794 = vmatprep.subr.bf16.mxu0 0
      %795 = vmatpush1.bf16.xpose.msra.mxu0 0
      %796 = vmatprep.subr.bf16.mxu0 0
      %797 = vmatpush1.bf16.xpose.msra.mxu0 0
      %798 = vmatprep.subr.bf16.mxu0 0
      %799 = vmatpush1.bf16.xpose.msra.mxu0 0
      %800 = vmatprep.subr.bf16.mxu0 0
      %801 = vmatpush1.bf16.xpose.msra.mxu0 0
      %802 = vmatprep.mubr.bf16.mxu0 0
      %803 = vmatmul.mubr.bf16.gmra.mrb[0].mxu0 %v765
      %v804 = vpop.f32.mrb[0].mxu0
      %v805 = vadd.f32 0.0, %v804
      %v806 = vpop.f32.mrb[0].mxu0
      %v807 = vpop.f32.mrb[0].mxu0
      %v808 = vpop.f32.mrb[0].mxu0
      %809 = vdwg.mxu0
      %v810 = vsel %vm129, 1, 0
      %vm811 = vcmp.eq.s32.totalorder %v810, 1
      %v812 = vsel %vm811, %v469, -inf
      %v813 = vsel %vm811, %v517, -inf
      %v814 = vsel %vm811, %v565, -inf
      %v815 = vsel %vm811, %v613, -inf
      %v816 = vsel %vm811, %v661, -inf
      %v817 = vsel %vm811, %v709, -inf
      %v818 = vsel %vm811, %v757, -inf
      %v819 = vsel %vm811, %v805, -inf
      %v820 = vsel %vm144, %v812, -inf
      %821 = vmax.xlane.f32.xlu0 %v820
      %v822 = vpop.xlane.xlu0 %821
      %v823 = vsel %vm144, %v813, -inf
      %824 = vmax.xlane.f32.xlu0 %v823
      %v825 = vpop.xlane.xlu0 %824
      %v826 = vsel %vm144, %v814, -inf
      %827 = vmax.xlane.f32.xlu0 %v826
      %v828 = vpop.xlane.xlu0 %827
      %v829 = vsel %vm144, %v815, -inf
      %830 = vmax.xlane.f32.xlu0 %v829
      %v831 = vpop.xlane.xlu0 %830
      %v832 = vsel %vm144, %v816, -inf
      %833 = vmax.xlane.f32.xlu0 %v832
      %v834 = vpop.xlane.xlu0 %833
      %v835 = vsel %vm144, %v817, -inf
      %836 = vmax.xlane.f32.xlu0 %v835
      %v837 = vpop.xlane.xlu0 %836
      %v838 = vsel %vm144, %v818, -inf
      %839 = vmax.xlane.f32.xlu0 %v838
      %v840 = vpop.xlane.xlu0 %839
      %v841 = vsel %vm144, %v819, -inf
      %842 = vmax.xlane.f32.xlu0 %v841
      %v843 = vpop.xlane.xlu0 %842
      %v844 = vsub.f32 %v812, %v822
      %v845 = vsub.f32 %v813, %v825
      %v846 = vsub.f32 %v814, %v828
      %v847 = vsub.f32 %v815, %v831
      %v848 = vsub.f32 %v816, %v834
      %v849 = vsub.f32 %v817, %v837
      %v850 = vsub.f32 %v818, %v840
      %v851 = vsub.f32 %v819, %v843
      %v852 = vmul.f32 %v844, 1.442695
      %v853 = vpow.pop %v852
      %v854 = vmul.f32 %v845, 1.442695
      %v855 = vpow.pop %v854
      %v856 = vmul.f32 %v846, 1.442695
      %v857 = vpow.pop %v856
      %v858 = vmul.f32 %v847, 1.442695
      %v859 = vpow.pop %v858
      %v860 = vmul.f32 %v848, 1.442695
      %v861 = vpow.pop %v860
      %v862 = vmul.f32 %v849, 1.442695
      %v863 = vpow.pop %v862
      %v864 = vmul.f32 %v850, 1.442695
      %v865 = vpow.pop %v864
      %v866 = vmul.f32 %v851, 1.442695
      %v867 = vpow.pop %v866
      %v868 = vsel %vm144, %v853, 0.0
      %869 = vadd.xlane.f32.xlu0 %v868
      %v870 = vpop.xlane.xlu0 %869
      %v871 = vsel %vm144, %v855, 0.0
      %872 = vadd.xlane.f32.xlu0 %v871
      %v873 = vpop.xlane.xlu0 %872
      %v874 = vsel %vm144, %v857, 0.0
      %875 = vadd.xlane.f32.xlu0 %v874
      %v876 = vpop.xlane.xlu0 %875
      %v877 = vsel %vm144, %v859, 0.0
      %878 = vadd.xlane.f32.xlu0 %v877
      %v879 = vpop.xlane.xlu0 %878
      %v880 = vsel %vm144, %v861, 0.0
      %881 = vadd.xlane.f32.xlu0 %v880
      %v882 = vpop.xlane.xlu0 %881
      %v883 = vsel %vm144, %v863, 0.0
      %884 = vadd.xlane.f32.xlu0 %v883
      %v885 = vpop.xlane.xlu0 %884
      %v886 = vsel %vm144, %v865, 0.0
      %887 = vadd.xlane.f32.xlu0 %v886
      %v888 = vpop.xlane.xlu0 %887
      %v889 = vsel %vm144, %v867, 0.0
      %890 = vadd.xlane.f32.xlu0 %v889
      %v891 = vpop.xlane.xlu0 %890
      %v892 = vrcp.pop %v870
      %v893 = vrcp.pop %v873
      %v894 = vrcp.pop %v876
      %v895 = vrcp.pop %v879
      %v896 = vrcp.pop %v882
      %v897 = vrcp.pop %v885
      %v898 = vrcp.pop %v888
      %v899 = vrcp.pop %v891
      %v900 = vmul.f32 %v853, %v892
      %v901 = vmul.f32 %v855, %v893
      %v902 = vmul.f32 %v857, %v894
      %v903 = vmul.f32 %v859, %v895
      %v904 = vmul.f32 %v861, %v896
      %v905 = vmul.f32 %v863, %v897
      %v906 = vmul.f32 %v865, %v898
      %v907 = vmul.f32 %v867, %v899
      %v908 = vpack.c.bf16 %v900, %v900
      %v909 = vpack.c.bf16 %v901, %v901
      %v910 = vpack.c.bf16 %v902, %v902
      %v911 = vpack.c.bf16 %v903, %v903
      %v912 = vpack.c.bf16 %v904, %v904
      %v913 = vpack.c.bf16 %v905, %v905
      %v914 = vpack.c.bf16 %v906, %v906
      %v915 = vpack.c.bf16 %v907, %v907
      %916 = vrot.lane.b32.xlu0 %v418, 112
      %v917 = vpop.permute.xlu0 %916
      %v919 = vsel %vm144, %v908, 0
      %v922 = vsel %vm333, %v917, 0
      %924 = vmatprep.subr.bf16.mxu0 0
      %925 = vmatpush1.bf16.msra.mxu0 %v922
      %926 = vmatprep.subr.bf16.mxu0 0
      %927 = vmatpush1.bf16.msra.mxu0 0
      %928 = vmatprep.subr.bf16.mxu0 0
      %929 = vmatpush1.bf16.msra.mxu0 0
      %930 = vmatprep.subr.bf16.mxu0 0
      %931 = vmatpush1.bf16.msra.mxu0 0
      %932 = vmatprep.subr.bf16.mxu0 0
      %933 = vmatpush1.bf16.msra.mxu0 0
      %934 = vmatprep.subr.bf16.mxu0 0
      %935 = vmatpush1.bf16.msra.mxu0 0
      %936 = vmatprep.subr.bf16.mxu0 0
      %937 = vmatpush1.bf16.msra.mxu0 0
      %938 = vmatprep.subr.bf16.mxu0 0
      %939 = vmatpush1.bf16.msra.mxu0 0
      %940 = vmatprep.subr.bf16.mxu0 0
      %941 = vmatpush1.bf16.msra.mxu0 0
      %942 = vmatprep.subr.bf16.mxu0 0
      %943 = vmatpush1.bf16.msra.mxu0 0
      %944 = vmatprep.subr.bf16.mxu0 0
      %945 = vmatpush1.bf16.msra.mxu0 0
      %946 = vmatprep.subr.bf16.mxu0 0
      %947 = vmatpush1.bf16.msra.mxu0 0
      %948 = vmatprep.subr.bf16.mxu0 0
      %949 = vmatpush1.bf16.msra.mxu0 0
      %950 = vmatprep.subr.bf16.mxu0 0
      %951 = vmatpush1.bf16.msra.mxu0 0
      %952 = vmatprep.subr.bf16.mxu0 0
      %953 = vmatpush1.bf16.msra.mxu0 0
      %954 = vmatprep.subr.bf16.mxu0 0
      %955 = vmatpush1.bf16.msra.mxu0 0
      %956 = vmatprep.mubr.bf16.mxu0 0
      %957 = vmatmul.mubr.bf16.gmra.mrb[0].mxu0 %v919
      %v958 = vpop.f32.mrb[0].mxu0
      %v959 = vadd.f32 0.0, %v958
      %v960 = vpop.f32.mrb[0].mxu0
      %v961 = vpop.f32.mrb[0].mxu0
      %v962 = vpop.f32.mrb[0].mxu0
      %963 = vdwg.mxu0
      %964 = vrot.lane.b32.xlu0 %v419, 112
      %v965 = vpop.permute.xlu0 %964
      %v967 = vsel %vm144, %v909, 0
      %v970 = vsel %vm333, %v965, 0
      %972 = vmatprep.subr.bf16.mxu0 0
      %973 = vmatpush1.bf16.msra.mxu0 %v970
      %974 = vmatprep.subr.bf16.mxu0 0
      %975 = vmatpush1.bf16.msra.mxu0 0
      %976 = vmatprep.subr.bf16.mxu0 0
      %977 = vmatpush1.bf16.msra.mxu0 0
      %978 = vmatprep.subr.bf16.mxu0 0
      %979 = vmatpush1.bf16.msra.mxu0 0
      %980 = vmatprep.subr.bf16.mxu0 0
      %981 = vmatpush1.bf16.msra.mxu0 0
      %982 = vmatprep.subr.bf16.mxu0 0
      %983 = vmatpush1.bf16.msra.mxu0 0
      %984 = vmatprep.subr.bf16.mxu0 0
      %985 = vmatpush1.bf16.msra.mxu0 0
      %986 = vmatprep.subr.bf16.mxu0 0
      %987 = vmatpush1.bf16.msra.mxu0 0
      %988 = vmatprep.subr.bf16.mxu0 0
      %989 = vmatpush1.bf16.msra.mxu0 0
      %990 = vmatprep.subr.bf16.mxu0 0
      %991 = vmatpush1.bf16.msra.mxu0 0
      %992 = vmatprep.subr.bf16.mxu0 0
      %993 = vmatpush1.bf16.msra.mxu0 0
      %994 = vmatprep.subr.bf16.mxu0 0
      %995 = vmatpush1.bf16.msra.mxu0 0
      %996 = vmatprep.subr.bf16.mxu0 0
      %997 = vmatpush1.bf16.msra.mxu0 0
      %998 = vmatprep.subr.bf16.mxu0 0
      %999 = vmatpush1.bf16.msra.mxu0 0
      %1000 = vmatprep.subr.bf16.mxu0 0
      %1001 = vmatpush1.bf16.msra.mxu0 0
      %1002 = vmatprep.subr.bf16.mxu0 0
      %1003 = vmatpush1.bf16.msra.mxu0 0
      %1004 = vmatprep.mubr.bf16.mxu0 0
      %1005 = vmatmul.mubr.bf16.gmra.mrb[0].mxu0 %v967
      %v1006 = vpop.f32.mrb[0].mxu0
      %v1007 = vadd.f32 0.0, %v1006
      %v1008 = vpop.f32.mrb[0].mxu0
      %v1009 = vpop.f32.mrb[0].mxu0
      %v1010 = vpop.f32.mrb[0].mxu0
      %1011 = vdwg.mxu0
      %1012 = vrot.lane.b32.xlu0 %v420, 112
      %v1013 = vpop.permute.xlu0 %1012
      %v1015 = vsel %vm144, %v910, 0
      %v1018 = vsel %vm333, %v1013, 0
      %1020 = vmatprep.subr.bf16.mxu0 0
      %1021 = vmatpush1.bf16.msra.mxu0 %v1018
      %1022 = vmatprep.subr.bf16.mxu0 0
      %1023 = vmatpush1.bf16.msra.mxu0 0
      %1024 = vmatprep.subr.bf16.mxu0 0
      %1025 = vmatpush1.bf16.msra.mxu0 0
      %1026 = vmatprep.subr.bf16.mxu0 0
      %1027 = vmatpush1.bf16.msra.mxu0 0
      %1028 = vmatprep.subr.bf16.mxu0 0
      %1029 = vmatpush1.bf16.msra.mxu0 0
      %1030 = vmatprep.subr.bf16.mxu0 0
      %1031 = vmatpush1.bf16.msra.mxu0 0
      %1032 = vmatprep.subr.bf16.mxu0 0
      %1033 = vmatpush1.bf16.msra.mxu0 0
      %1034 = vmatprep.subr.bf16.mxu0 0
      %1035 = vmatpush1.bf16.msra.mxu0 0
      %1036 = vmatprep.subr.bf16.mxu0 0
      %1037 = vmatpush1.bf16.msra.mxu0 0
      %1038 = vmatprep.subr.bf16.mxu0 0
      %1039 = vmatpush1.bf16.msra.mxu0 0
      %1040 = vmatprep.subr.bf16.mxu0 0
      %1041 = vmatpush1.bf16.msra.mxu0 0
      %1042 = vmatprep.subr.bf16.mxu0 0
      %1043 = vmatpush1.bf16.msra.mxu0 0
      %1044 = vmatprep.subr.bf16.mxu0 0
      %1045 = vmatpush1.bf16.msra.mxu0 0
      %1046 = vmatprep.subr.bf16.mxu0 0
      %1047 = vmatpush1.bf16.msra.mxu0 0
      %1048 = vmatprep.subr.bf16.mxu0 0
      %1049 = vmatpush1.bf16.msra.mxu0 0
      %1050 = vmatprep.subr.bf16.mxu0 0
      %1051 = vmatpush1.bf16.msra.mxu0 0
      %1052 = vmatprep.mubr.bf16.mxu0 0
      %1053 = vmatmul.mubr.bf16.gmra.mrb[0].mxu0 %v1015
      %v1054 = vpop.f32.mrb[0].mxu0
      %v1055 = vadd.f32 0.0, %v1054
      %v1056 = vpop.f32.mrb[0].mxu0
      %v1057 = vpop.f32.mrb[0].mxu0
      %v1058 = vpop.f32.mrb[0].mxu0
      %1059 = vdwg.mxu0
      %1060 = vrot.lane.b32.xlu0 %v421, 112
      %v1061 = vpop.permute.xlu0 %1060
      %v1063 = vsel %vm144, %v911, 0
      %v1066 = vsel %vm333, %v1061, 0
      %1068 = vmatprep.subr.bf16.mxu0 0
      %1069 = vmatpush1.bf16.msra.mxu0 %v1066
      %1070 = vmatprep.subr.bf16.mxu0 0
      %1071 = vmatpush1.bf16.msra.mxu0 0
      %1072 = vmatprep.subr.bf16.mxu0 0
      %1073 = vmatpush1.bf16.msra.mxu0 0
      %1074 = vmatprep.subr.bf16.mxu0 0
      %1075 = vmatpush1.bf16.msra.mxu0 0
      %1076 = vmatprep.subr.bf16.mxu0 0
      %1077 = vmatpush1.bf16.msra.mxu0 0
      %1078 = vmatprep.subr.bf16.mxu0 0
      %1079 = vmatpush1.bf16.msra.mxu0 0
      %1080 = vmatprep.subr.bf16.mxu0 0
      %1081 = vmatpush1.bf16.msra.mxu0 0
      %1082 = vmatprep.subr.bf16.mxu0 0
      %1083 = vmatpush1.bf16.msra.mxu0 0
      %1084 = vmatprep.subr.bf16.mxu0 0
      %1085 = vmatpush1.bf16.msra.mxu0 0
      %1086 = vmatprep.subr.bf16.mxu0 0
      %1087 = vmatpush1.bf16.msra.mxu0 0
      %1088 = vmatprep.subr.bf16.mxu0 0
      %1089 = vmatpush1.bf16.msra.mxu0 0
      %1090 = vmatprep.subr.bf16.mxu0 0
      %1091 = vmatpush1.bf16.msra.mxu0 0
      %1092 = vmatprep.subr.bf16.mxu0 0
      %1093 = vmatpush1.bf16.msra.mxu0 0
      %1094 = vmatprep.subr.bf16.mxu0 0
      %1095 = vmatpush1.bf16.msra.mxu0 0
      %1096 = vmatprep.subr.bf16.mxu0 0
      %1097 = vmatpush1.bf16.msra.mxu0 0
      %1098 = vmatprep.subr.bf16.mxu0 0
      %1099 = vmatpush1.bf16.msra.mxu0 0
      %1100 = vmatprep.mubr.bf16.mxu0 0
      %1101 = vmatmul.mubr.bf16.gmra.mrb[0].mxu0 %v1063
      %v1102 = vpop.f32.mrb[0].mxu0
      %v1103 = vadd.f32 0.0, %v1102
      %v1104 = vpop.f32.mrb[0].mxu0
      %v1105 = vpop.f32.mrb[0].mxu0
      %v1106 = vpop.f32.mrb[0].mxu0
      %1107 = vdwg.mxu0
      %1108 = vrot.lane.b32.xlu0 %v422, 112
      %v1109 = vpop.permute.xlu0 %1108
      %v1111 = vsel %vm144, %v912, 0
      %v1114 = vsel %vm333, %v1109, 0
      %1116 = vmatprep.subr.bf16.mxu0 0
      %1117 = vmatpush1.bf16.msra.mxu0 %v1114
      %1118 = vmatprep.subr.bf16.mxu0 0
      %1119 = vmatpush1.bf16.msra.mxu0 0
      %1120 = vmatprep.subr.bf16.mxu0 0
      %1121 = vmatpush1.bf16.msra.mxu0 0
      %1122 = vmatprep.subr.bf16.mxu0 0
      %1123 = vmatpush1.bf16.msra.mxu0 0
      %1124 = vmatprep.subr.bf16.mxu0 0
      %1125 = vmatpush1.bf16.msra.mxu0 0
      %1126 = vmatprep.subr.bf16.mxu0 0
      %1127 = vmatpush1.bf16.msra.mxu0 0
      %1128 = vmatprep.subr.bf16.mxu0 0
      %1129 = vmatpush1.bf16.msra.mxu0 0
      %1130 = vmatprep.subr.bf16.mxu0 0
      %1131 = vmatpush1.bf16.msra.mxu0 0
      %1132 = vmatprep.subr.bf16.mxu0 0
      %1133 = vmatpush1.bf16.msra.mxu0 0
      %1134 = vmatprep.subr.bf16.mxu0 0
      %1135 = vmatpush1.bf16.msra.mxu0 0
      %1136 = vmatprep.subr.bf16.mxu0 0
      %1137 = vmatpush1.bf16.msra.mxu0 0
      %1138 = vmatprep.subr.bf16.mxu0 0
      %1139 = vmatpush1.bf16.msra.mxu0 0
      %1140 = vmatprep.subr.bf16.mxu0 0
      %1141 = vmatpush1.bf16.msra.mxu0 0
      %1142 = vmatprep.subr.bf16.mxu0 0
      %1143 = vmatpush1.bf16.msra.mxu0 0
      %1144 = vmatprep.subr.bf16.mxu0 0
      %1145 = vmatpush1.bf16.msra.mxu0 0
      %1146 = vmatprep.subr.bf16.mxu0 0
      %1147 = vmatpush1.bf16.msra.mxu0 0
      %1148 = vmatprep.mubr.bf16.mxu0 0
      %1149 = vmatmul.mubr.bf16.gmra.mrb[0].mxu0 %v1111
      %v1150 = vpop.f32.mrb[0].mxu0
      %v1151 = vadd.f32 0.0, %v1150
      %v1152 = vpop.f32.mrb[0].mxu0
      %v1153 = vpop.f32.mrb[0].mxu0
      %v1154 = vpop.f32.mrb[0].mxu0
      %1155 = vdwg.mxu0
      %1156 = vrot.lane.b32.xlu0 %v423, 112
      %v1157 = vpop.permute.xlu0 %1156
      %v1159 = vsel %vm144, %v913, 0
      %v1162 = vsel %vm333, %v1157, 0
      %1164 = vmatprep.subr.bf16.mxu0 0
      %1165 = vmatpush1.bf16.msra.mxu0 %v1162
      %1166 = vmatprep.subr.bf16.mxu0 0
      %1167 = vmatpush1.bf16.msra.mxu0 0
      %1168 = vmatprep.subr.bf16.mxu0 0
      %1169 = vmatpush1.bf16.msra.mxu0 0
      %1170 = vmatprep.subr.bf16.mxu0 0
      %1171 = vmatpush1.bf16.msra.mxu0 0
      %1172 = vmatprep.subr.bf16.mxu0 0
      %1173 = vmatpush1.bf16.msra.mxu0 0
      %1174 = vmatprep.subr.bf16.mxu0 0
      %1175 = vmatpush1.bf16.msra.mxu0 0
      %1176 = vmatprep.subr.bf16.mxu0 0
      %1177 = vmatpush1.bf16.msra.mxu0 0
      %1178 = vmatprep.subr.bf16.mxu0 0
      %1179 = vmatpush1.bf16.msra.mxu0 0
      %1180 = vmatprep.subr.bf16.mxu0 0
      %1181 = vmatpush1.bf16.msra.mxu0 0
      %1182 = vmatprep.subr.bf16.mxu0 0
      %1183 = vmatpush1.bf16.msra.mxu0 0
      %1184 = vmatprep.subr.bf16.mxu0 0
      %1185 = vmatpush1.bf16.msra.mxu0 0
      %1186 = vmatprep.subr.bf16.mxu0 0
      %1187 = vmatpush1.bf16.msra.mxu0 0
      %1188 = vmatprep.subr.bf16.mxu0 0
      %1189 = vmatpush1.bf16.msra.mxu0 0
      %1190 = vmatprep.subr.bf16.mxu0 0
      %1191 = vmatpush1.bf16.msra.mxu0 0
      %1192 = vmatprep.subr.bf16.mxu0 0
      %1193 = vmatpush1.bf16.msra.mxu0 0
      %1194 = vmatprep.subr.bf16.mxu0 0
      %1195 = vmatpush1.bf16.msra.mxu0 0
      %1196 = vmatprep.mubr.bf16.mxu0 0
      %1197 = vmatmul.mubr.bf16.gmra.mrb[0].mxu0 %v1159
      %v1198 = vpop.f32.mrb[0].mxu0
      %v1199 = vadd.f32 0.0, %v1198
      %v1200 = vpop.f32.mrb[0].mxu0
      %v1201 = vpop.f32.mrb[0].mxu0
      %v1202 = vpop.f32.mrb[0].mxu0
      %1203 = vdwg.mxu0
      %1204 = vrot.lane.b32.xlu0 %v424, 112
      %v1205 = vpop.permute.xlu0 %1204
      %v1207 = vsel %vm144, %v914, 0
      %v1210 = vsel %vm333, %v1205, 0
      %1212 = vmatprep.subr.bf16.mxu0 0
      %1213 = vmatpush1.bf16.msra.mxu0 %v1210
      %1214 = vmatprep.subr.bf16.mxu0 0
      %1215 = vmatpush1.bf16.msra.mxu0 0
      %1216 = vmatprep.subr.bf16.mxu0 0
      %1217 = vmatpush1.bf16.msra.mxu0 0
      %1218 = vmatprep.subr.bf16.mxu0 0
      %1219 = vmatpush1.bf16.msra.mxu0 0
      %1220 = vmatprep.subr.bf16.mxu0 0
      %1221 = vmatpush1.bf16.msra.mxu0 0
      %1222 = vmatprep.subr.bf16.mxu0 0
      %1223 = vmatpush1.bf16.msra.mxu0 0
      %1224 = vmatprep.subr.bf16.mxu0 0
      %1225 = vmatpush1.bf16.msra.mxu0 0
      %1226 = vmatprep.subr.bf16.mxu0 0
      %1227 = vmatpush1.bf16.msra.mxu0 0
      %1228 = vmatprep.subr.bf16.mxu0 0
      %1229 = vmatpush1.bf16.msra.mxu0 0
      %1230 = vmatprep.subr.bf16.mxu0 0
      %1231 = vmatpush1.bf16.msra.mxu0 0
      %1232 = vmatprep.subr.bf16.mxu0 0
      %1233 = vmatpush1.bf16.msra.mxu0 0
      %1234 = vmatprep.subr.bf16.mxu0 0
      %1235 = vmatpush1.bf16.msra.mxu0 0
      %1236 = vmatprep.subr.bf16.mxu0 0
      %1237 = vmatpush1.bf16.msra.mxu0 0
      %1238 = vmatprep.subr.bf16.mxu0 0
      %1239 = vmatpush1.bf16.msra.mxu0 0
      %1240 = vmatprep.subr.bf16.mxu0 0
      %1241 = vmatpush1.bf16.msra.mxu0 0
      %1242 = vmatprep.subr.bf16.mxu0 0
      %1243 = vmatpush1.bf16.msra.mxu0 0
      %1244 = vmatprep.mubr.bf16.mxu0 0
      %1245 = vmatmul.mubr.bf16.gmra.mrb[0].mxu0 %v1207
      %v1246 = vpop.f32.mrb[0].mxu0
      %v1247 = vadd.f32 0.0, %v1246
      %v1248 = vpop.f32.mrb[0].mxu0
      %v1249 = vpop.f32.mrb[0].mxu0
      %v1250 = vpop.f32.mrb[0].mxu0
      %1251 = vdwg.mxu0
      %1252 = vrot.lane.b32.xlu0 %v425, 112
      %v1253 = vpop.permute.xlu0 %1252
      %v1255 = vsel %vm144, %v915, 0
      %v1258 = vsel %vm333, %v1253, 0
      %1260 = vmatprep.subr.bf16.mxu0 0
      %1261 = vmatpush1.bf16.msra.mxu0 %v1258
      %1262 = vmatprep.subr.bf16.mxu0 0
      %1263 = vmatpush1.bf16.msra.mxu0 0
      %1264 = vmatprep.subr.bf16.mxu0 0
      %1265 = vmatpush1.bf16.msra.mxu0 0
      %1266 = vmatprep.subr.bf16.mxu0 0
      %1267 = vmatpush1.bf16.msra.mxu0 0
      %1268 = vmatprep.subr.bf16.mxu0 0
      %1269 = vmatpush1.bf16.msra.mxu0 0
      %1270 = vmatprep.subr.bf16.mxu0 0
      %1271 = vmatpush1.bf16.msra.mxu0 0
      %1272 = vmatprep.subr.bf16.mxu0 0
      %1273 = vmatpush1.bf16.msra.mxu0 0
      %1274 = vmatprep.subr.bf16.mxu0 0
      %1275 = vmatpush1.bf16.msra.mxu0 0
      %1276 = vmatprep.subr.bf16.mxu0 0
      %1277 = vmatpush1.bf16.msra.mxu0 0
      %1278 = vmatprep.subr.bf16.mxu0 0
      %1279 = vmatpush1.bf16.msra.mxu0 0
      %1280 = vmatprep.subr.bf16.mxu0 0
      %1281 = vmatpush1.bf16.msra.mxu0 0
      %1282 = vmatprep.subr.bf16.mxu0 0
      %1283 = vmatpush1.bf16.msra.mxu0 0
      %1284 = vmatprep.subr.bf16.mxu0 0
      %1285 = vmatpush1.bf16.msra.mxu0 0
      %1286 = vmatprep.subr.bf16.mxu0 0
      %1287 = vmatpush1.bf16.msra.mxu0 0
      %1288 = vmatprep.subr.bf16.mxu0 0
      %1289 = vmatpush1.bf16.msra.mxu0 0
      %1290 = vmatprep.subr.bf16.mxu0 0
      %1291 = vmatpush1.bf16.msra.mxu0 0
      %1292 = vmatprep.mubr.bf16.mxu0 0
      %1293 = vmatmul.mubr.bf16.gmra.mrb[0].mxu0 %v1255
      %v1294 = vpop.f32.mrb[0].mxu0
      %v1295 = vadd.f32 0.0, %v1294
      %v1296 = vpop.f32.mrb[0].mxu0
      %v1297 = vpop.f32.mrb[0].mxu0
      %v1298 = vpop.f32.mrb[0].mxu0
      %1299 = vdwg.mxu0
      %v1300 = vadd.f32 %v136, %v959
      %v1301 = vadd.f32 %v137, %v1007
      %v1302 = vadd.f32 %v138, %v1055
      %v1303 = vadd.f32 %v139, %v1103
      %v1304 = vadd.f32 %v140, %v1151
      %v1305 = vadd.f32 %v141, %v1199
      %v1306 = vadd.f32 %v142, %v1247
      %v1307 = vadd.f32 %v143, %v1295
      %v1308 = vsel %vm144, %v1300, 0.0
      %1309 = vadd.xlane.f32.xlu0 %v1308
      %v1310 = vpop.xlane.xlu0 %1309
      %v1311 = vsel %vm144, %v1301, 0.0
      %1312 = vadd.xlane.f32.xlu0 %v1311
      %v1313 = vpop.xlane.xlu0 %1312
      %v1314 = vsel %vm144, %v1302, 0.0
      %1315 = vadd.xlane.f32.xlu0 %v1314
      %v1316 = vpop.xlane.xlu0 %1315
      %v1317 = vsel %vm144, %v1303, 0.0
      %1318 = vadd.xlane.f32.xlu0 %v1317
      %v1319 = vpop.xlane.xlu0 %1318
      %v1320 = vsel %vm144, %v1304, 0.0
      %1321 = vadd.xlane.f32.xlu0 %v1320
      %v1322 = vpop.xlane.xlu0 %1321
      %v1323 = vsel %vm144, %v1305, 0.0
      %1324 = vadd.xlane.f32.xlu0 %v1323
      %v1325 = vpop.xlane.xlu0 %1324
      %v1326 = vsel %vm144, %v1306, 0.0
      %1327 = vadd.xlane.f32.xlu0 %v1326
      %v1328 = vpop.xlane.xlu0 %1327
      %v1329 = vsel %vm144, %v1307, 0.0
      %1330 = vadd.xlane.f32.xlu0 %v1329
      %v1331 = vpop.xlane.xlu0 %1330
      %v1332 = vmul.f32 %v1310, %v169
      %v1333 = vmul.f32 %v1313, %v169
      %v1334 = vmul.f32 %v1316, %v169
      %v1335 = vmul.f32 %v1319, %v169
      %v1336 = vmul.f32 %v1322, %v169
      %v1337 = vmul.f32 %v1325, %v169
      %v1338 = vmul.f32 %v1328, %v169
      %v1339 = vmul.f32 %v1331, %v169
      %v1340 = vsub.f32 %v1300, %v1332
      %v1341 = vsub.f32 %v1301, %v1333
      %v1342 = vsub.f32 %v1302, %v1334
      %v1343 = vsub.f32 %v1303, %v1335
      %v1344 = vsub.f32 %v1304, %v1336
      %v1345 = vsub.f32 %v1305, %v1337
      %v1346 = vsub.f32 %v1306, %v1338
      %v1347 = vsub.f32 %v1307, %v1339
      %v1348 = vmul.f32 %v1340, %v1340
      %v1349 = vmul.f32 %v1341, %v1341
      %v1350 = vmul.f32 %v1342, %v1342
      %v1351 = vmul.f32 %v1343, %v1343
      %v1352 = vmul.f32 %v1344, %v1344
      %v1353 = vmul.f32 %v1345, %v1345
      %v1354 = vmul.f32 %v1346, %v1346
      %v1355 = vmul.f32 %v1347, %v1347
      %v1356 = vsel %vm144, %v1348, 0.0
      %1357 = vadd.xlane.f32.xlu0 %v1356
      %v1358 = vpop.xlane.xlu0 %1357
      %v1359 = vsel %vm144, %v1349, 0.0
      %1360 = vadd.xlane.f32.xlu0 %v1359
      %v1361 = vpop.xlane.xlu0 %1360
      %v1362 = vsel %vm144, %v1350, 0.0
      %1363 = vadd.xlane.f32.xlu0 %v1362
      %v1364 = vpop.xlane.xlu0 %1363
      %v1365 = vsel %vm144, %v1351, 0.0
      %1366 = vadd.xlane.f32.xlu0 %v1365
      %v1367 = vpop.xlane.xlu0 %1366
      %v1368 = vsel %vm144, %v1352, 0.0
      %1369 = vadd.xlane.f32.xlu0 %v1368
      %v1370 = vpop.xlane.xlu0 %1369
      %v1371 = vsel %vm144, %v1353, 0.0
      %1372 = vadd.xlane.f32.xlu0 %v1371
      %v1373 = vpop.xlane.xlu0 %1372
      %v1374 = vsel %vm144, %v1354, 0.0
      %1375 = vadd.xlane.f32.xlu0 %v1374
      %v1376 = vpop.xlane.xlu0 %1375
      %v1377 = vsel %vm144, %v1355, 0.0
      %1378 = vadd.xlane.f32.xlu0 %v1377
      %v1379 = vpop.xlane.xlu0 %1378
      %v1380 = vmul.f32 %v1358, 0.14285715
      %v1381 = vmul.f32 %v1361, 0.14285715
      %v1382 = vmul.f32 %v1364, 0.14285715
      %v1383 = vmul.f32 %v1367, 0.14285715
      %v1384 = vmul.f32 %v1370, 0.14285715
      %v1385 = vmul.f32 %v1373, 0.14285715
      %v1386 = vmul.f32 %v1376, 0.14285715
      %v1387 = vmul.f32 %v1379, 0.14285715
      %v1388 = vrsqrt.pop %v1380
      %v1389 = vmul.f32 %v1380, %v1388
      %vm1390 = vcmp.eq.f32.partialorder %v1380, inf
      %v1391 = vsel %vm1390, %v1380, %v1389
      %vm1392 = vcmp.eq.f32.partialorder %v1380, 0.0
      %v1393 = vand.u32 %v1380, 2147483648
      %v1394 = vsel %vm1392, %v1393, %v1391
      %v1395 = vrsqrt.pop %v1381
      %v1396 = vmul.f32 %v1381, %v1395
      %vm1397 = vcmp.eq.f32.partialorder %v1381, inf
      %v1398 = vsel %vm1397, %v1381, %v1396
      %vm1399 = vcmp.eq.f32.partialorder %v1381, 0.0
      %v1400 = vand.u32 %v1381, 2147483648
      %v1401 = vsel %vm1399, %v1400, %v1398
      %v1402 = vrsqrt.pop %v1382
      %v1403 = vmul.f32 %v1382, %v1402
      %vm1404 = vcmp.eq.f32.partialorder %v1382, inf
      %v1405 = vsel %vm1404, %v1382, %v1403
      %vm1406 = vcmp.eq.f32.partialorder %v1382, 0.0
      %v1407 = vand.u32 %v1382, 2147483648
      %v1408 = vsel %vm1406, %v1407, %v1405
      %v1409 = vrsqrt.pop %v1383
      %v1410 = vmul.f32 %v1383, %v1409
      %vm1411 = vcmp.eq.f32.partialorder %v1383, inf
      %v1412 = vsel %vm1411, %v1383, %v1410
      %vm1413 = vcmp.eq.f32.partialorder %v1383, 0.0
      %v1414 = vand.u32 %v1383, 2147483648
      %v1415 = vsel %vm1413, %v1414, %v1412
      %v1416 = vrsqrt.pop %v1384
      %v1417 = vmul.f32 %v1384, %v1416
      %vm1418 = vcmp.eq.f32.partialorder %v1384, inf
      %v1419 = vsel %vm1418, %v1384, %v1417
      %vm1420 = vcmp.eq.f32.partialorder %v1384, 0.0
      %v1421 = vand.u32 %v1384, 2147483648
      %v1422 = vsel %vm1420, %v1421, %v1419
      %v1423 = vrsqrt.pop %v1385
      %v1424 = vmul.f32 %v1385, %v1423
      %vm1425 = vcmp.eq.f32.partialorder %v1385, inf
      %v1426 = vsel %vm1425, %v1385, %v1424
      %vm1427 = vcmp.eq.f32.partialorder %v1385, 0.0
      %v1428 = vand.u32 %v1385, 2147483648
      %v1429 = vsel %vm1427, %v1428, %v1426
      %v1430 = vrsqrt.pop %v1386
      %v1431 = vmul.f32 %v1386, %v1430
      %vm1432 = vcmp.eq.f32.partialorder %v1386, inf
      %v1433 = vsel %vm1432, %v1386, %v1431
      %vm1434 = vcmp.eq.f32.partialorder %v1386, 0.0
      %v1435 = vand.u32 %v1386, 2147483648
      %v1436 = vsel %vm1434, %v1435, %v1433
      %v1437 = vrsqrt.pop %v1387
      %v1438 = vmul.f32 %v1387, %v1437
      %vm1439 = vcmp.eq.f32.partialorder %v1387, inf
      %v1440 = vsel %vm1439, %v1387, %v1438
      %vm1441 = vcmp.eq.f32.partialorder %v1387, 0.0
      %v1442 = vand.u32 %v1387, 2147483648
      %v1443 = vsel %vm1441, %v1442, %v1440
      %v1444 = vadd.f32 %v1394, 1e-06
      %v1445 = vadd.f32 %v1401, 1e-06
      %v1446 = vadd.f32 %v1408, 1e-06
      %v1447 = vadd.f32 %v1415, 1e-06
      %v1448 = vadd.f32 %v1422, 1e-06
      %v1449 = vadd.f32 %v1429, 1e-06
      %v1450 = vadd.f32 %v1436, 1e-06
      %v1451 = vadd.f32 %v1443, 1e-06
      %v1452 = vrcp.pop %v1444
      %v1453 = vrcp.pop %v1445
      %v1454 = vrcp.pop %v1446
      %v1455 = vrcp.pop %v1447
      %v1456 = vrcp.pop %v1448
      %v1457 = vrcp.pop %v1449
      %v1458 = vrcp.pop %v1450
      %v1459 = vrcp.pop %v1451
      %v1460 = vmul.f32 %v1340, %v1452
      %v1461 = vmul.f32 %v1341, %v1453
      %v1462 = vmul.f32 %v1342, %v1454
      %v1463 = vmul.f32 %v1343, %v1455
      %v1464 = vmul.f32 %v1344, %v1456
      %v1465 = vmul.f32 %v1345, %v1457
      %v1466 = vmul.f32 %v1346, %v1458
      %v1467 = vmul.f32 %v1347, %v1459
      %v1468 = vadd.f32 %v1460, 1.0
      %v1469 = vadd.f32 %v1461, 1.0
      %v1470 = vadd.f32 %v1462, 1.0
      %v1471 = vadd.f32 %v1463, 1.0
      %v1472 = vadd.f32 %v1464, 1.0
      %v1473 = vadd.f32 %v1465, 1.0
      %v1474 = vadd.f32 %v1466, 1.0
      %v1475 = vadd.f32 %v1467, 1.0
      %v1476 = vpack.c.bf16 %v1469, %v1468
      %v1477 = vpack.c.bf16 %v1471, %v1470
      %v1478 = vpack.c.bf16 %v1473, %v1472
      %v1479 = vpack.c.bf16 %v1475, %v1474
      %s1480 = smul.addr %s131, 4
      %s1481 = scalar_lea.vmem [#allocation8], %s1480
      %v1482 = vld [vmem:[%s1481] sm:$0xf]
      %s1483 = scalar_lea.vmem %s4, %s131
      %v1484 = vld [vmem:[%s1483] sm:$0x1]
      %v1486 = vlaneseq
      %v1487 = vshrl.u32 %v1486, 7
      %v1488 = vsub.s32 0, %v1487
      %v1489 = vrot.slane %v1484, %v1488
      %v1492 = vsel %vm144, %v1476, 0
      %v1495 = vsel %vm144, %v1477, 0
      %v1498 = vsel %vm144, %v1478, 0
      %v1501 = vsel %vm144, %v1479, 0
      %v1504 = vsel %vm333, %v1482, 0
      %1506 = vmatprep.subr.bf16.mxu0 0
      %1507 = vmatpush1.bf16.msra.mxu0 %v1504
      %1508 = vmatprep.subr.bf16.mxu0 0
      %1509 = vmatpush1.bf16.msra.mxu0 0
      %1510 = vmatprep.subr.bf16.mxu0 0
      %1511 = vmatpush1.bf16.msra.mxu0 0
      %1512 = vmatprep.subr.bf16.mxu0 0
      %1513 = vmatpush1.bf16.msra.mxu0 0
      %1514 = vmatprep.subr.bf16.mxu0 0
      %1515 = vmatpush1.bf16.msra.mxu0 0
      %1516 = vmatprep.subr.bf16.mxu0 0
      %1517 = vmatpush1.bf16.msra.mxu0 0
      %1518 = vmatprep.subr.bf16.mxu0 0
      %1519 = vmatpush1.bf16.msra.mxu0 0
      %1520 = vmatprep.subr.bf16.mxu0 0
      %1521 = vmatpush1.bf16.msra.mxu0 0
      %1522 = vmatprep.subr.bf16.mxu0 0
      %1523 = vmatpush1.bf16.msra.mxu0 0
      %1524 = vmatprep.subr.bf16.mxu0 0
      %1525 = vmatpush1.bf16.msra.mxu0 0
      %1526 = vmatprep.subr.bf16.mxu0 0
      %1527 = vmatpush1.bf16.msra.mxu0 0
      %1528 = vmatprep.subr.bf16.mxu0 0
      %1529 = vmatpush1.bf16.msra.mxu0 0
      %1530 = vmatprep.subr.bf16.mxu0 0
      %1531 = vmatpush1.bf16.msra.mxu0 0
      %1532 = vmatprep.subr.bf16.mxu0 0
      %1533 = vmatpush1.bf16.msra.mxu0 0
      %1534 = vmatprep.subr.bf16.mxu0 0
      %1535 = vmatpush1.bf16.msra.mxu0 0
      %1536 = vmatprep.subr.bf16.mxu0 0
      %1537 = vmatpush1.bf16.msra.mxu0 0
      %1538 = vmatprep.mubr.bf16.mxu0 0
      %1539 = vmatmul.mubr.bf16.gmra.mrb[0].mxu0 %v1492
      %v1540 = vpop.f32.mrb[0].mxu0
      %v1541 = vadd.f32 %v1489, %v1540
      %v1542 = vpop.f32.mrb[0].mxu0
      %v1543 = vpop.f32.mrb[0].mxu0
      %v1544 = vadd.f32 %v1489, %v1543
      %v1545 = vpop.f32.mrb[0].mxu0
      %1546 = vmatprep.mubr.bf16.mxu0 0
      %1547 = vmatmul.mubr.bf16.gmra.mrb[0].mxu0 %v1495
      %v1548 = vpop.f32.mrb[0].mxu0
      %v1549 = vadd.f32 %v1489, %v1548
      %v1550 = vpop.f32.mrb[0].mxu0
      %v1551 = vpop.f32.mrb[0].mxu0
      %v1552 = vadd.f32 %v1489, %v1551
      %v1553 = vpop.f32.mrb[0].mxu0
      %1554 = vmatprep.mubr.bf16.mxu0 0
      %1555 = vmatmul.mubr.bf16.gmra.mrb[0].mxu0 %v1498
      %v1556 = vpop.f32.mrb[0].mxu0
      %v1557 = vadd.f32 %v1489, %v1556
      %v1558 = vpop.f32.mrb[0].mxu0
      %v1559 = vpop.f32.mrb[0].mxu0
      %v1560 = vadd.f32 %v1489, %v1559
      %v1561 = vpop.f32.mrb[0].mxu0
      %1562 = vmatprep.mubr.bf16.mxu0 0
      %1563 = vmatmul.mubr.bf16.gmra.mrb[0].mxu0 %v1501
      %v1564 = vpop.f32.mrb[0].mxu0
      %v1565 = vadd.f32 %v1489, %v1564
      %v1566 = vpop.f32.mrb[0].mxu0
      %v1567 = vpop.f32.mrb[0].mxu0
      %v1568 = vadd.f32 %v1489, %v1567
      %v1569 = vpop.f32.mrb[0].mxu0
      %1570 = vdwg.mxu0
      %v1571 = vpack.c.bf16 %v1544, %v1541
      %v1572 = vpack.c.bf16 %v1552, %v1549
      %v1573 = vpack.c.bf16 %v1560, %v1557
      %v1574 = vpack.c.bf16 %v1568, %v1565
      %s1575 = smul.addr %s131, 4
      %s1576 = scalar_lea.vmem [#allocation10], %s1575
      %v1577 = vld [vmem:[%s1576] sm:$0xf]
      %s1578 = scalar_lea.vmem %s6, %s131
      %v1579 = vld [vmem:[%s1578] sm:$0x1]
      %v1581 = vlaneseq
      %v1582 = vshrl.u32 %v1581, 7
      %v1583 = vsub.s32 0, %v1582
      %v1584 = vrot.slane %v1579, %v1583
      %v1587 = vsel %vm144, %v1571, 0
      %v1590 = vsel %vm144, %v1572, 0
      %v1593 = vsel %vm144, %v1573, 0
      %v1596 = vsel %vm144, %v1574, 0
      %v1599 = vsel %vm333, %v1577, 0
      %1601 = vmatprep.subr.bf16.mxu0 0
      %1602 = vmatpush1.bf16.msra.mxu0 %v1599
      %1603 = vmatprep.subr.bf16.mxu0 0
      %1604 = vmatpush1.bf16.msra.mxu0 0
      %1605 = vmatprep.subr.bf16.mxu0 0
      %1606 = vmatpush1.bf16.msra.mxu0 0
      %1607 = vmatprep.subr.bf16.mxu0 0
      %1608 = vmatpush1.bf16.msra.mxu0 0
      %1609 = vmatprep.subr.bf16.mxu0 0
      %1610 = vmatpush1.bf16.msra.mxu0 0
      %1611 = vmatprep.subr.bf16.mxu0 0
      %1612 = vmatpush1.bf16.msra.mxu0 0
      %1613 = vmatprep.subr.bf16.mxu0 0
      %1614 = vmatpush1.bf16.msra.mxu0 0
      %1615 = vmatprep.subr.bf16.mxu0 0
      %1616 = vmatpush1.bf16.msra.mxu0 0
      %1617 = vmatprep.subr.bf16.mxu0 0
      %1618 = vmatpush1.bf16.msra.mxu0 0
      %1619 = vmatprep.subr.bf16.mxu0 0
      %1620 = vmatpush1.bf16.msra.mxu0 0
      %1621 = vmatprep.subr.bf16.mxu0 0
      %1622 = vmatpush1.bf16.msra.mxu0 0
      %1623 = vmatprep.subr.bf16.mxu0 0
      %1624 = vmatpush1.bf16.msra.mxu0 0
      %1625 = vmatprep.subr.bf16.mxu0 0
      %1626 = vmatpush1.bf16.msra.mxu0 0
      %1627 = vmatprep.subr.bf16.mxu0 0
      %1628 = vmatpush1.bf16.msra.mxu0 0
      %1629 = vmatprep.subr.bf16.mxu0 0
      %1630 = vmatpush1.bf16.msra.mxu0 0
      %1631 = vmatprep.subr.bf16.mxu0 0
      %1632 = vmatpush1.bf16.msra.mxu0 0
      %1633 = vmatprep.mubr.bf16.mxu0 0
      %1634 = vmatmul.mubr.bf16.gmra.mrb[0].mxu0 %v1587
      %v1635 = vpop.f32.mrb[0].mxu0
      %v1636 = vadd.f32 %v1584, %v1635
      %v1637 = vpop.f32.mrb[0].mxu0
      %v1638 = vpop.f32.mrb[0].mxu0
      %v1639 = vadd.f32 %v1584, %v1638
      %v1640 = vpop.f32.mrb[0].mxu0
      %1641 = vmatprep.mubr.bf16.mxu0 0
      %1642 = vmatmul.mubr.bf16.gmra.mrb[0].mxu0 %v1590
      %v1643 = vpop.f32.mrb[0].mxu0
      %v1644 = vadd.f32 %v1584, %v1643
      %v1645 = vpop.f32.mrb[0].mxu0
      %v1646 = vpop.f32.mrb[0].mxu0
      %v1647 = vadd.f32 %v1584, %v1646
      %v1648 = vpop.f32.mrb[0].mxu0
      %1649 = vmatprep.mubr.bf16.mxu0 0
      %1650 = vmatmul.mubr.bf16.gmra.mrb[0].mxu0 %v1593
      %v1651 = vpop.f32.mrb[0].mxu0
      %v1652 = vadd.f32 %v1584, %v1651
      %v1653 = vpop.f32.mrb[0].mxu0
      %v1654 = vpop.f32.mrb[0].mxu0
      %v1655 = vadd.f32 %v1584, %v1654
      %v1656 = vpop.f32.mrb[0].mxu0
      %1657 = vmatprep.mubr.bf16.mxu0 0
      %1658 = vmatmul.mubr.bf16.gmra.mrb[0].mxu0 %v1596
      %v1659 = vpop.f32.mrb[0].mxu0
      %v1660 = vadd.f32 %v1584, %v1659
      %v1661 = vpop.f32.mrb[0].mxu0
      %v1662 = vpop.f32.mrb[0].mxu0
      %v1663 = vadd.f32 %v1584, %v1662
      %v1664 = vpop.f32.mrb[0].mxu0
      %1665 = vdwg.mxu0
      %v1666 = vmax.f32 %v1636, 0.0
      %v1667 = vmax.f32 %v1639, 0.0
      %v1668 = vmax.f32 %v1644, 0.0
      %v1669 = vmax.f32 %v1647, 0.0
      %v1670 = vmax.f32 %v1652, 0.0
      %v1671 = vmax.f32 %v1655, 0.0
      %v1672 = vmax.f32 %v1660, 0.0
      %v1673 = vmax.f32 %v1663, 0.0
      %v1674 = vadd.f32 %v1300, %v1666
      %v1675 = vadd.f32 %v1301, %v1667
      %v1676 = vadd.f32 %v1302, %v1668
      %v1677 = vadd.f32 %v1303, %v1669
      %v1678 = vadd.f32 %v1304, %v1670
      %v1679 = vadd.f32 %v1305, %v1671
      %v1680 = vadd.f32 %v1306, %v1672
      %v1681 = vadd.f32 %v1307, %v1673
    $region62: #{tpu_custom_call.1} parent=1 // loop_footer
      %s135 = sadd.s32 1, %s131
    $region63: #{tpu_custom_call.1} parent=1 // loop_footer_branch
      %130 = sbr.rel target = $region59
    $region64: #{tpu_custom_call.1} parent=1 // loop_exit
      _
    %v1682 = vpack.c.bf16 %v137, %v136
    %v1683 = vpack.c.bf16 %v139, %v138
    %v1684 = vpack.c.bf16 %v141, %v140
    %v1685 = vpack.c.bf16 %v143, %v142
    %v1686 = vld [vmem:[%s7] sm:$0xf]
    %v1687 = vld [vmem:[%s8] sm:$0x1]
    %v1689 = vlaneseq
    %v1690 = vshrl.u32 %v1689, 7
    %v1691 = vsub.s32 0, %v1690
    %v1692 = vrot.slane %v1687, %v1691
    %vm1694 = vcmask 64512
    %v1696 = vsel %vm1694, %v1682, 0
    %v1699 = vsel %vm1694, %v1683, 0
    %v1702 = vsel %vm1694, %v1684, 0
    %v1705 = vsel %vm1694, %v1685, 0
    %vm1707 = vcmask 1043456
    %v1709 = vsel %vm1707, %v1686, 0
    %1711 = vmatprep.subr.bf16.mxu0 0
    %1712 = vmatpush1.bf16.msra.mxu0 %v1709
    %1713 = vmatprep.subr.bf16.mxu0 0
    %1714 = vmatpush1.bf16.msra.mxu0 0
    %1715 = vmatprep.subr.bf16.mxu0 0
    %1716 = vmatpush1.bf16.msra.mxu0 0
    %1717 = vmatprep.subr.bf16.mxu0 0
    %1718 = vmatpush1.bf16.msra.mxu0 0
    %1719 = vmatprep.subr.bf16.mxu0 0
    %1720 = vmatpush1.bf16.msra.mxu0 0
    %1721 = vmatprep.subr.bf16.mxu0 0
    %1722 = vmatpush1.bf16.msra.mxu0 0
    %1723 = vmatprep.subr.bf16.mxu0 0
    %1724 = vmatpush1.bf16.msra.mxu0 0
    %1725 = vmatprep.subr.bf16.mxu0 0
    %1726 = vmatpush1.bf16.msra.mxu0 0
    %1727 = vmatprep.subr.bf16.mxu0 0
    %1728 = vmatpush1.bf16.msra.mxu0 0
    %1729 = vmatprep.subr.bf16.mxu0 0
    %1730 = vmatpush1.bf16.msra.mxu0 0
    %1731 = vmatprep.subr.bf16.mxu0 0
    %1732 = vmatpush1.bf16.msra.mxu0 0
    %1733 = vmatprep.subr.bf16.mxu0 0
    %1734 = vmatpush1.bf16.msra.mxu0 0
    %1735 = vmatprep.subr.bf16.mxu0 0
    %1736 = vmatpush1.bf16.msra.mxu0 0
    %1737 = vmatprep.subr.bf16.mxu0 0
    %1738 = vmatpush1.bf16.msra.mxu0 0
    %1739 = vmatprep.subr.bf16.mxu0 0
    %1740 = vmatpush1.bf16.msra.mxu0 0
    %1741 = vmatprep.subr.bf16.mxu0 0
    %1742 = vmatpush1.bf16.msra.mxu0 0
    %1743 = vmatprep.mubr.bf16.mxu0 0
    %1744 = vmatmul.mubr.bf16.gmra.mrb[0].mxu0 %v1696
    %v1745 = vpop.f32.mrb[0].mxu0
    %v1746 = vadd.f32 %v1692, %v1745
    %v1747 = vpop.f32.mrb[0].mxu0
    %v1748 = vpop.f32.mrb[0].mxu0
    %v1749 = vadd.f32 %v1692, %v1748
    %v1750 = vpop.f32.mrb[0].mxu0
    %1751 = vmatprep.mubr.bf16.mxu0 0
    %1752 = vmatmul.mubr.bf16.gmra.mrb[0].mxu0 %v1699
    %v1753 = vpop.f32.mrb[0].mxu0
    %v1754 = vadd.f32 %v1692, %v1753
    %v1755 = vpop.f32.mrb[0].mxu0
    %v1756 = vpop.f32.mrb[0].mxu0
    %v1757 = vadd.f32 %v1692, %v1756
    %v1758 = vpop.f32.mrb[0].mxu0
    %1759 = vmatprep.mubr.bf16.mxu0 0
    %1760 = vmatmul.mubr.bf16.gmra.mrb[0].mxu0 %v1702
    %v1761 = vpop.f32.mrb[0].mxu0
    %v1762 = vadd.f32 %v1692, %v1761
    %v1763 = vpop.f32.mrb[0].mxu0
    %v1764 = vpop.f32.mrb[0].mxu0
    %v1765 = vadd.f32 %v1692, %v1764
    %v1766 = vpop.f32.mrb[0].mxu0
    %1767 = vmatprep.mubr.bf16.mxu0 0
    %1768 = vmatmul.mubr.bf16.gmra.mrb[0].mxu0 %v1705
    %v1769 = vpop.f32.mrb[0].mxu0
    %v1770 = vadd.f32 %v1692, %v1769
    %v1771 = vpop.f32.mrb[0].mxu0
    %v1772 = vpop.f32.mrb[0].mxu0
    %v1773 = vadd.f32 %v1692, %v1772
    %v1774 = vpop.f32.mrb[0].mxu0
    %1775 = vdwg.mxu0
    %1776 = vst.msk [vmem:[#allocation11] sm:$0xff] %vm1694, %v1746
    %1777 = vst.msk [vmem:[#allocation11 + $0x8] sm:$0xff] %vm1694, %v1749
    %1778 = vst.msk [vmem:[#allocation11 + $0x10] sm:$0xff] %vm1694, %v1754
    %1779 = vst.msk [vmem:[#allocation11 + $0x18] sm:$0xff] %vm1694, %v1757
    %1780 = vst.msk [vmem:[#allocation11 + $0x20] sm:$0xff] %vm1694, %v1762
    %1781 = vst.msk [vmem:[#allocation11 + $0x28] sm:$0xff] %vm1694, %v1765
    %1782 = vst.msk [vmem:[#allocation11 + $0x30] sm:$0xff] %vm1694, %v1770
    %1783 = vst.msk [vmem:[#allocation11 + $0x38] sm:$0xff] %vm1694, %v1773
    // Predicated region
    $region65: #{tpu_custom_call.1} parent=1 // pred_check
      _
    $region66: #{tpu_custom_call.1} parent=1 // pred_check_branch
      %1785 = sbr.rel (0) target = $region68
    $region67: #{tpu_custom_call.1} parent=1 // pred_region
      %s1787 = ssub.s32 1024, 1024
      %1788 = vsyncadd [#allocation4], %s1787
      %s1789 = sshll.u32 [#allocation11], 4
      %s1790 = int_to_ptr.vmem [resolvable:$true] %s1789
      %1795 = dma.vmem_to_hbm [thread:$0]  %s1790, 1024, %s9, [#allocation4], 128, 128, 8
    $region68: #{tpu_custom_call.1} parent=1 // pred_fallthru
      _
    // Predicated region
    $region69: #{tpu_custom_call.1} parent=1 // pred_check
      _
    $region70: #{tpu_custom_call.1} parent=1 // pred_check_branch
      %1797 = sbr.rel (0) target = $region72
    $region71: #{tpu_custom_call.1} parent=1 // pred_region
      %1798 = dma.done [#allocation4], 1024
    $region72: #{tpu_custom_call.1} parent=1 // pred_fallthru
      _
    %1799 = vsyncpa [#allocation3], 1
    %1800 = vsyncpa [#allocation6], 1
    %1801 = vsyncpa [#allocation9], 1
    %1802 = vsyncpa [#allocation4], 1

</llo_original>
